<compile_context>
chip_gen: v6e
topology: v6e:2x2x1
jax: 0.10.0
libtpu: 0.0.40
codegen_flags: <defaults>
</compile_context>

<pallas_src>
import functools

import jax
import jax.numpy as jnp
from jax import lax
from jax.experimental import pallas as pl
from jax.experimental.pallas import tpu as pltpu


# ----------------------------------------------------------------------------
# Chip-aware scoped-VMEM limit: ~75% of physical VMEM, capped at 100 MiB.
#   v5e / v6e (128 MiB) -> ~96-100 MiB ;  v7x (64 MiB) -> 48 MiB.
# Falls back to 48 MiB if the hardware query is unavailable.
# ----------------------------------------------------------------------------
@functools.lru_cache(maxsize=None)
def _vmem_limit_bytes():
    cap = None
    try:
        info = pltpu.get_tpu_info()
        for name in ("vmem_capacity_bytes", "vmem_bytes", "vmem_size_bytes"):
            val = getattr(info, name, None)
            if val:
                cap = int(val)
                break
    except Exception:
        cap = None
    if not cap:
        cap = 64 * 1024 * 1024          # conservative: v7x per-TensorCore VMEM
    return int(min(cap * 3 // 4, 100 * 1024 * 1024))


def _compiler_params(dimension_semantics):
    return pltpu.CompilerParams(
        dimension_semantics=dimension_semantics,
        vmem_limit_bytes=_vmem_limit_bytes())


def _pick_tile(dim, target, align):
    """Largest tile <= target that divides `dim` and is a multiple of `align`.
    Falls back to the full dimension (always a legal block shape)."""
    if dim <= target:
        return dim
    t = (target // align) * align
    while t >= align:
        if dim % t == 0:
            return t
        t -= align
    return dim


def _rotate_half_2d(x):
    # NOTE: pltpu.roll(x, D//2, -1) was considered (review suggestion), but both
    # call sites are now OFF the per-kv-tile hot path (K RoPE is fused into the
    # projection epilogue; Q RoPE runs once per q tile), so the concatenate is
    # kept for lowering robustness at head_dim = 64 (< one lane register).
    d = x.shape[-1]
    return jnp.concatenate([-x[:, d // 2:], x[:, : d // 2]], axis=-1)


# ----------------------------------------------------------------------------
# Tiled linear projection kernels (K-reduction pipelined matmul)
# ----------------------------------------------------------------------------
def _linear_bias_kernel(x_ref, w_ref, b_ref, o_ref, acc_ref, *, compute_dtype):
    @pl.when(pl.program_id(2) == 0)
    def _():
        acc_ref[...] = jnp.zeros(acc_ref.shape, acc_ref.dtype)

    acc_ref[...] += jnp.dot(
        x_ref[...].astype(compute_dtype),
        w_ref[...].astype(compute_dtype),
        preferred_element_type=jnp.float32)

    @pl.when(pl.program_id(2) == pl.num_programs(2) - 1)
    def _():
        o_ref[...] = (acc_ref[...] + b_ref[...].astype(jnp.float32)).astype(o_ref.dtype)


def _linear_nobias_kernel(x_ref, w_ref, o_ref, acc_ref, *, compute_dtype):
    @pl.when(pl.program_id(2) == 0)
    def _():
        acc_ref[...] = jnp.zeros(acc_ref.shape, acc_ref.dtype)

    acc_ref[...] += jnp.dot(
        x_ref[...].astype(compute_dtype),
        w_ref[...].astype(compute_dtype),
        preferred_element_type=jnp.float32)

    @pl.when(pl.program_id(2) == pl.num_programs(2) - 1)
    def _():
        o_ref[...] = acc_ref[...].astype(o_ref.dtype)


def linear(x, w_t, b=None, *, tm=256, tn=256, tk=512, compute_dtype=jnp.bfloat16):
    """y = x @ w_t (+ b).  x:(M,K); w_t:(K,N) pre-transposed; b:(N,) or None."""
    M, K = x.shape
    N = w_t.shape[1]
    tm = _pick_tile(M, tm, 8)
    tn = _pick_tile(N, tn, 128)
    tk = _pick_tile(K, tk, 128)
    grid = (M // tm, N // tn, K // tk)

    in_specs = [
        pl.BlockSpec((tm, tk), lambda i, j, k: (i, k)),
        pl.BlockSpec((tk, tn), lambda i, j, k: (k, j)),
    ]
    args = [x, w_t]
    if b is not None:
        in_specs.append(pl.BlockSpec((1, tn), lambda i, j, k: (0, j)))
        args.append(b.reshape(1, N))
        kernel = functools.partial(_linear_bias_kernel, compute_dtype=compute_dtype)
    else:
        kernel = functools.partial(_linear_nobias_kernel, compute_dtype=compute_dtype)

    return pl.pallas_call(
        kernel,
        out_shape=jax.ShapeDtypeStruct((M, N), x.dtype),
        grid=grid,
        in_specs=in_specs,
        out_specs=pl.BlockSpec((tm, tn), lambda i, j, k: (i, j)),
        scratch_shapes=[pltpu.VMEM((tm, tn), jnp.float32)],
        compiler_params=_compiler_params(("parallel", "parallel", "arbitrary")),
    )(*args)


# ----------------------------------------------------------------------------
# Fused K/V projection with K-RoPE, packed head-major output
# ----------------------------------------------------------------------------
def _kv_proj_rope_kernel(x_ref, w_ref, b_ref, cos_ref, sin_ref, o_ref, acc_ref,
                         *, head_dim, compute_dtype):
    @pl.when(pl.program_id(2) == 0)
    def _():
        acc_ref[...] = jnp.zeros(acc_ref.shape, acc_ref.dtype)

    acc_ref[...] += jnp.dot(
        x_ref[...].astype(compute_dtype),
        w_ref[...].astype(compute_dtype),
        preferred_element_type=jnp.float32)

    @pl.when(pl.program_id(2) == pl.num_programs(2) - 1)
    def _():
        D = head_dim
        res = acc_ref[...] + b_ref[...].astype(jnp.float32)       # (tm, 2D)
        k_part = res[:, :D]
        v_part = res[:, D:]
        c = cos_ref[...].astype(jnp.float32)
        s = sin_ref[...].astype(jnp.float32)
        k_rot = k_part * c + _rotate_half_2d(k_part) * s
        # Single lane-dense (tm, 2D) store: 2D >= 128 lanes.
        o_ref[...] = jnp.concatenate([k_rot, v_part], axis=-1).astype(o_ref.dtype)


def kv_proj_rope(x, w_kv, b_kv, cos, sin, *, head_dim, tm=256, tk=512,
                 compute_dtype=jnp.bfloat16, out_dtype=None):
    """Fused K/V projection with fused K-RoPE, packed head-major output.

    x:(M,K); w_kv:(Hkv,K,2D); b_kv:(Hkv,1,2D); cos,sin:(M,D)  ->  (Hkv, M, 2D)
    Output columns [0:D] = RoPE(K), [D:2D] = V.  x is streamed once for both K
    and V, the MXU N width is 2D (>=128) and the stores are lane-dense, and the
    attention kernel needs no K-side RoPE at all.
    """
    M, K = x.shape
    Hkv, _, D2 = w_kv.shape
    D = head_dim
    assert D2 == 2 * D
    out_dtype = out_dtype or x.dtype
    tm = _pick_tile(M, tm, 8)
    tk = _pick_tile(K, tk, 128)
    grid = (Hkv, M // tm, K // tk)

    return pl.pallas_call(
        functools.partial(_kv_proj_rope_kernel, head_dim=D,
                          compute_dtype=compute_dtype),
        out_shape=jax.ShapeDtypeStruct((Hkv, M, 2 * D), out_dtype),
        grid=grid,
        in_specs=[
            pl.BlockSpec((tm, tk), lambda h, m, k: (m, k)),
            pl.BlockSpec((None, tk, 2 * D), lambda h, m, k: (h, k, 0)),
            pl.BlockSpec((None, 1, 2 * D), lambda h, m, k: (h, 0, 0)),
            pl.BlockSpec((tm, D), lambda h, m, k: (m, 0)),
            pl.BlockSpec((tm, D), lambda h, m, k: (m, 0)),
        ],
        out_specs=pl.BlockSpec((None, tm, 2 * D), lambda h, m, k: (h, m, 0)),
        scratch_shapes=[pltpu.VMEM((tm, 2 * D), jnp.float32)],
        compiler_params=_compiler_params(("parallel", "parallel", "arbitrary")),
    )(x, w_kv, b_kv, cos, sin)


# ----------------------------------------------------------------------------
# Flash-style GQA attention (fused n_rep heads, q-tiled, K already RoPE'd)
# ----------------------------------------------------------------------------
def _flash_gqa_kernel(q_ref, kv_ref, cos_ref, sin_ref, o_ref,
                      qrot_ref, m_ref, l_ref, acc_ref,
                      *, n_rep, head_dim, compute_dtype, approx_recip):
    # q_ref/o_ref : (block_q, n_rep*D) -- one packed GQA group, lane-dense
    # kv_ref      : (block_kv, 2*D)    -- packed [RoPE(K) | V] of the kv head
    # cos/sin_ref : (block_q, D)       -- Q-side RoPE only
    D = head_dim
    block_q = q_ref.shape[0]
    kv_step = pl.program_id(3)
    num_kv = pl.num_programs(3)

    @pl.when(kv_step == 0)
    def _():
        m_ref[...] = jnp.full(m_ref.shape, -jnp.inf, m_ref.dtype)
        l_ref[...] = jnp.zeros(l_ref.shape, l_ref.dtype)
        acc_ref[...] = jnp.zeros(acc_ref.shape, acc_ref.dtype)
        # Rotate + pre-scale Q once per (batch, kv-group, q-tile); pack the
        # n_rep heads as (n_rep*block_q, D) so every kv step issues ONE wide
        # QK^T dot instead of n_rep small ones.  Stored in compute_dtype with
        # 1/sqrt(D) folded in.
        scale = 1.0 / (D ** 0.5)
        cos_q = cos_ref[...].astype(jnp.float32)
        sin_q = sin_ref[...].astype(jnp.float32)
        for r in range(n_rep):
            qh = q_ref[:, r * D:(r + 1) * D].astype(jnp.float32)
            qh = (qh * cos_q + _rotate_half_2d(qh) * sin_q) * scale
            qrot_ref[r * block_q:(r + 1) * block_q, :] = qh.astype(compute_dtype)

    # K was already RoPE-rotated in the projection kernel.
    k = kv_ref[:, :D].astype(compute_dtype)
    v = kv_ref[:, D:].astype(compute_dtype)

    # Single (n_rep*block_q, D) x (D, block_kv) MXU push per kv tile.
    s = lax.dot_general(qrot_ref[...], k, (((1,), (1,)), ((), ())),
                        preferred_element_type=jnp.float32)

    m_prev = m_ref[...]
    m_new = jnp.maximum(m_prev, jnp.max(s, axis=-1, keepdims=True))
    alpha = jnp.exp(m_prev - m_new)
    p = jnp.exp(s - m_new)
    l_ref[...] = alpha * l_ref[...] + jnp.sum(p, axis=-1, keepdims=True)
    acc_ref[...] = alpha * acc_ref[...] + jnp.dot(
        p.astype(compute_dtype), v, preferred_element_type=jnp.float32)
    m_ref[...] = m_new

    @pl.when(kv_step == num_kv - 1)
    def _():
        inv_l = pl.reciprocal(l_ref[...], approx=approx_recip)
        out = acc_ref[...] * inv_l                          # (n_rep*block_q, D)
        # Per-head static-slice stores into the flat (B, S, H*D) layout
        # (no concatenate / extra copy in the epilogue).
        for r in range(n_rep):
            o_ref[:, r * D:(r + 1) * D] = (
                out[r * block_q:(r + 1) * block_q, :].astype(o_ref.dtype))


def flash_gqa_attention(q, kv, cos, sin, *, num_heads, num_kv_heads, head_dim,
                        block_q=128, block_kv=256, compute_dtype=jnp.bfloat16):
    """q:(B,S,H*D); kv:(Hkv,B,S,2*D) packed [RoPE(K)|V]; cos,sin:(B,S,D)."""
    B, S, _ = q.shape
    H, Hkv, D = num_heads, num_kv_heads, head_dim
    n_rep = H // Hkv
    group = n_rep * D
    # Packed-group q/o tiles must be lane-aligned so stores stay dense.
    assert group % 128 == 0 or group == H * D, (
        "n_rep * head_dim must be a multiple of 128 lanes")
    # TODO(synk): support n_rep*head_dim that is not a 128-lane multiple
    # (would need a padded q/o layout).

    block_q = _pick_tile(S, block_q, 8)
    block_kv = _pick_tile(S, block_kv, 8)
    grid = (B, Hkv, S // block_q, S // block_kv)
    rows = n_rep * block_q

    kernel = functools.partial(
        _flash_gqa_kernel, n_rep=n_rep, head_dim=D,
        compute_dtype=compute_dtype,
        approx_recip=(compute_dtype != jnp.float32))

    return pl.pallas_call(
        kernel,
        out_shape=jax.ShapeDtypeStruct((B, S, H * D), q.dtype),
        grid=grid,
        in_specs=[
            pl.BlockSpec((None, block_q, group), lambda b, g, qi, kv: (b, qi, g)),
            pl.BlockSpec((None, None, block_kv, 2 * D),
                         lambda b, g, qi, kv: (g, b, kv, 0)),
            pl.BlockSpec((None, block_q, D), lambda b, g, qi, kv: (b, qi, 0)),
            pl.BlockSpec((None, block_q, D), lambda b, g, qi, kv: (b, qi, 0)),
        ],
        out_specs=pl.BlockSpec((None, block_q, group),
                               lambda b, g, qi, kv: (b, qi, g)),
        scratch_shapes=[
            pltpu.VMEM((rows, D), compute_dtype),   # rotated + pre-scaled Q
            pltpu.VMEM((rows, 1), jnp.float32),     # running max
            pltpu.VMEM((rows, 1), jnp.float32),     # running sum
            pltpu.VMEM((rows, D), jnp.float32),     # output accumulator
        ],
        compiler_params=_compiler_params(
            ("parallel", "parallel", "parallel", "arbitrary")),
    )(q, kv, cos, sin)


# ----------------------------------------------------------------------------
# RoPE cache (matches RotaryEmbedding.__init__: emb = cat(freqs, freqs, -1))
# ----------------------------------------------------------------------------
def rope_cache(dim, max_pos, base):
    inv_freq = 1.0 / (base ** (jnp.arange(0, dim, 2, dtype=jnp.float32) / dim))
    t = jnp.arange(max_pos, dtype=jnp.float32)
    freqs = jnp.outer(t, inv_freq)                      # (max_pos, dim/2)
    emb = jnp.concatenate([freqs, freqs], axis=-1)      # (max_pos, dim)
    return jnp.cos(emb), jnp.sin(emb)


# ----------------------------------------------------------------------------
# Parameter preparation (done ONCE, outside the jitted forward)
# ----------------------------------------------------------------------------
def prepare_params(params, cfg):
    Hkv = cfg["num_key_value_heads"]
    D = cfg["head_dim"]
    hidden = cfg["hidden_size"]
    cos_c, sin_c = rope_cache(D, cfg["max_position_embeddings"], cfg["rope_base"])
    # K/V weights packed per kv head: (Hkv, hidden, 2*D), cols [0:D]=K, [D:2D]=V.
    wk = params["wk"].reshape(Hkv, D, hidden)
    wv = params["wv"].reshape(Hkv, D, hidden)
    w_kv = jnp.transpose(jnp.concatenate([wk, wv], axis=1), (0, 2, 1))
    b_kv = jnp.concatenate([params["bk"].reshape(Hkv, 1, D),
                            params["bv"].reshape(Hkv, 1, D)], axis=-1)
    return {
        "wq_t": jnp.transpose(params["wq"]),     # (hidden, H*D)
        "bq": params["bq"],
        "wo_t": jnp.transpose(params["wo"]),     # (H*D, hidden)
        "w_kv": w_kv,                            # (Hkv, hidden, 2*D)
        "b_kv": b_kv,                            # (Hkv, 1, 2*D)
        "cos_cached": cos_c,
        "sin_cached": sin_c,
    }


# ----------------------------------------------------------------------------
# Full Attention.forward
# ----------------------------------------------------------------------------
def attention_forward(x, position_ids, prepared, cfg, compute_dtype=jnp.bfloat16):
    # TODO(synk): kv_cache / input_pos update path is not implemented
    # (self.kv_cache is None in the reference forward).
    B, S, hidden = x.shape
    H = cfg["num_attention_heads"]
    Hkv = cfg["num_key_value_heads"]
    D = cfg["head_dim"]
    M = B * S

    x2 = x.reshape(M, hidden)
    cos = prepared["cos_cached"][position_ids].reshape(M, D)
    sin = prepared["sin_cached"][position_ids].reshape(M, D)

    q = linear(x2, prepared["wq_t"], prepared["bq"],
               compute_dtype=compute_dtype)                       # (M, H*D)
    kv = kv_proj_rope(x2, prepared["w_kv"], prepared["b_kv"], cos, sin,
                      head_dim=D, compute_dtype=compute_dtype,
                      out_dtype=compute_dtype)                    # (Hkv, M, 2D)

    q = q.reshape(B, S, H * D)            # free reshape -- no transpose
    kv = kv.reshape(Hkv, B, S, 2 * D)     # already head-major, K pre-rotated

    y = flash_gqa_attention(q, kv,
                            cos.reshape(B, S, D), sin.reshape(B, S, D),
                            num_heads=H, num_kv_heads=Hkv, head_dim=D,
                            compute_dtype=compute_dtype)          # (B, S, H*D)

    out = linear(y.reshape(M, H * D), prepared["wo_t"], None,
                 compute_dtype=compute_dtype)                     # bias-less
    return out.reshape(B, S, hidden)


# ----------------------------------------------------------------------------
# Pure-JAX reference (same math, no Pallas) for verification
# ----------------------------------------------------------------------------
def attention_reference(x, position_ids, params, cfg):
    B, S, hidden = x.shape
    H, Hkv, D = cfg["num_attention_heads"], cfg["num_key_value_heads"], cfg["head_dim"]
    n_rep = H // Hkv

    def lin(xx, w, b):
        return xx @ w.T + b

    q = lin(x, params["wq"], params["bq"]).reshape(B, S, H, D).transpose(0, 2, 1, 3)
    k = lin(x, params["wk"], params["bk"]).reshape(B, S, Hkv, D).transpose(0, 2, 1, 3)
    v = lin(x, params["wv"], params["bv"]).reshape(B, S, Hkv, D).transpose(0, 2, 1, 3)

    cos_c, sin_c = rope_cache(D, cfg["max_position_embeddings"], cfg["rope_base"])
    cos = cos_c[position_ids][:, None, :, :]            # (B,1,S,D)
    sin = sin_c[position_ids][:, None, :, :]

    def rot_half(t):
        t1, t2 = t[..., : D // 2], t[..., D // 2:]
        return jnp.concatenate([-t2, t1], axis=-1)

    q = q * cos + rot_half(q) * sin
    k = k * cos + rot_half(k) * sin

    k = jnp.repeat(k, n_rep, axis=1)
    v = jnp.repeat(v, n_rep, axis=1)

    s = jnp.einsum("bhqd,bhkd->bhqk", q, k) / jnp.sqrt(jnp.float32(D))
    p = jax.nn.softmax(s, axis=-1)
    y = jnp.einsum("bhqk,bhkd->bhqd", p, v)
    y = y.transpose(0, 2, 1, 3).reshape(B, S, H * D)
    return y @ params["wo"].T


# ----------------------------------------------------------------------------
# Main
# ----------------------------------------------------------------------------
if __name__ == "__main__":
    # Small config consistent with ModelArgs semantics
    # (head_dim = hidden_size // num_attention_heads).
    cfg = dict(
        hidden_size=256,
        num_attention_heads=4,
        num_key_value_heads=2,
        head_dim=256 // 4,
        max_position_embeddings=64,
        rope_base=1000000.0,
    )
    B, S = 2, 8
    hidden = cfg["hidden_size"]
    H, Hkv, D = cfg["num_attention_heads"], cfg["num_key_value_heads"], cfg["head_dim"]

    key = jax.random.PRNGKey(0)
    keys = jax.random.split(key, 8)
    scale = 0.05
    params = {
        "wq": scale * jax.random.normal(keys[0], (H * D, hidden), jnp.float32),
        "bq": scale * jax.random.normal(keys[1], (H * D,), jnp.float32),
        "wk": scale * jax.random.normal(keys[2], (Hkv * D, hidden), jnp.float32),
        "bk": scale * jax.random.normal(keys[3], (Hkv * D,), jnp.float32),
        "wv": scale * jax.random.normal(keys[4], (Hkv * D, hidden), jnp.float32),
        "bv": scale * jax.random.normal(keys[5], (Hkv * D,), jnp.float32),
        "wo": scale * jax.random.normal(keys[6], (hidden, H * D), jnp.float32),
    }

    x = jax.random.normal(keys[7], (B, S, hidden), jnp.float32)
    position_ids = jnp.broadcast_to(jnp.arange(S, dtype=jnp.int32), (B, S))

    prepared = prepare_params(params, cfg)               # one-time weight prep
    ref = attention_reference(x, position_ids, params, cfg)

    # Strict correctness check: f32 compute, exact reciprocal.
    fwd_f32 = jax.jit(functools.partial(attention_forward, cfg=cfg,
                                        compute_dtype=jnp.float32))
    out = jax.block_until_ready(fwd_f32(x, position_ids, prepared))
    assert out.shape == (B, S, hidden), out.shape
    assert jnp.allclose(out, ref, atol=5e-4, rtol=5e-4), (
        float(jnp.max(jnp.abs(out - ref))))

    # Production path: bf16 MXU inputs (f32 accumulation), approx reciprocal.
    fwd_bf16 = jax.jit(functools.partial(attention_forward, cfg=cfg,
                                         compute_dtype=jnp.bfloat16))
    out_bf16 = jax.block_until_ready(fwd_bf16(x, position_ids, prepared))
    assert out_bf16.shape == (B, S, hidden), out_bf16.shape
    assert jnp.allclose(out_bf16, ref, atol=5e-2, rtol=5e-2), (
        float(jnp.max(jnp.abs(out_bf16 - ref))))

    print("KERNEL_OK")
</pallas_src>

<mosaic_0001>
module attributes {stable_mosaic.version = 11 : i64} {
  func.func @_linear_nobias_kernel(%arg0: i32, %arg1: i32, %arg2: i32, %arg3: memref<16x256xf32, #tpu.memory_space<vmem>>, %arg4: memref<256x256xf32, #tpu.memory_space<vmem>>, %arg5: memref<16x256xf32, #tpu.memory_space<vmem>>, %arg6: memref<16x256xf32, #tpu.memory_space<vmem>>) attributes {dimension_semantics = [#tpu.dimension_semantics<parallel>, #tpu.dimension_semantics<parallel>, #tpu.dimension_semantics<arbitrary>], iteration_bounds = array<i64: 1, 1, 1>, scalar_prefetch = 0 : i64, scratch_operands = 1 : i64, tpu.core_type = #tpu.core_type<tc>, window_params = [{transform_indices = @transform_0, window_bounds = array<i64: 16, 256>}, {transform_indices = @transform_1, window_bounds = array<i64: 256, 256>}, {transform_indices = @transform_2, window_bounds = array<i64: 16, 256>}]} {
    %c0_i32 = arith.constant 0 : i32
    %0 = arith.cmpi eq, %arg2, %c0_i32 : i32
    %1 = arith.extui %0 : i1 to i32
    %c0_i32_0 = arith.constant 0 : i32
    %2 = arith.cmpi ne, %1, %c0_i32_0 : i32
    scf.if %2 {
      %cst_10 = arith.constant 0.000000e+00 : f32
      %12 = vector.broadcast %cst_10 : f32 to vector<16x256xf32>
      %c0_11 = arith.constant 0 : index
      %c0_12 = arith.constant 0 : index
      %13 = vector.load %arg6[%c0_11, %c0_12] : memref<16x256xf32, #tpu.memory_space<vmem>>, vector<16x256xf32>
      tpu.vector_store %arg6[%c0_11, %c0_12], %12 {strides = array<i32>} : memref<16x256xf32, #tpu.memory_space<vmem>>, vector<16x256xf32>,
    } else {
    }
    %c0 = arith.constant 0 : index
    %c0_1 = arith.constant 0 : index
    %3 = vector.load %arg6[%c0, %c0_1] : memref<16x256xf32, #tpu.memory_space<vmem>>, vector<16x256xf32>
    %c0_2 = arith.constant 0 : index
    %c0_3 = arith.constant 0 : index
    %4 = vector.load %arg3[%c0_2, %c0_3] : memref<16x256xf32, #tpu.memory_space<vmem>>, vector<16x256xf32>
    %c0_4 = arith.constant 0 : index
    %c0_5 = arith.constant 0 : index
    %5 = vector.load %arg4[%c0_4, %c0_5] : memref<256x256xf32, #tpu.memory_space<vmem>>, vector<256x256xf32>
    %cst = arith.constant dense<0.000000e+00> : vector<16x256xf32>
    %6 = tpu.matmul %4, %5, %cst {dimension_numbers = #tpu.dot_dimension_numbers<[1], [0], [0], [1], [0, 0, 1, 1], [], []>} : vector<16x256xf32>, vector<256x256xf32>, vector<16x256xf32> -> vector<16x256xf32>
    %7 = arith.addf %3, %6 : vector<16x256xf32>
    %c0_6 = arith.constant 0 : index
    %c0_7 = arith.constant 0 : index
    %8 = vector.load %arg6[%c0_6, %c0_7] : memref<16x256xf32, #tpu.memory_space<vmem>>, vector<16x256xf32>
    tpu.vector_store %arg6[%c0_6, %c0_7], %7 {strides = array<i32>} : memref<16x256xf32, #tpu.memory_space<vmem>>, vector<16x256xf32>,
    %c0_i32_8 = arith.constant 0 : i32
    %9 = arith.cmpi eq, %arg2, %c0_i32_8 : i32
    %10 = arith.extui %9 : i1 to i32
    %c0_i32_9 = arith.constant 0 : i32
    %11 = arith.cmpi ne, %10, %c0_i32_9 : i32
    scf.if %11 {
      %c0_10 = arith.constant 0 : index
      %c0_11 = arith.constant 0 : index
      %12 = vector.load %arg6[%c0_10, %c0_11] : memref<16x256xf32, #tpu.memory_space<vmem>>, vector<16x256xf32>
      %c0_12 = arith.constant 0 : index
      %c0_13 = arith.constant 0 : index
      %13 = vector.load %arg5[%c0_12, %c0_13] : memref<16x256xf32, #tpu.memory_space<vmem>>, vector<16x256xf32>
      tpu.vector_store %arg5[%c0_12, %c0_13], %12 {strides = array<i32>} : memref<16x256xf32, #tpu.memory_space<vmem>>, vector<16x256xf32>,
    } else {
    }
    return
  }
  func.func @transform_0(%arg0: i32, %arg1: i32, %arg2: i32) -> (i32, i32) {
    %c0_i32 = arith.constant 0 : i32
    return %arg0, %arg2 : i32, i32
  }
  func.func @transform_1(%arg0: i32, %arg1: i32, %arg2: i32) -> (i32, i32) {
    %c0_i32 = arith.constant 0 : i32
    return %arg2, %arg1 : i32, i32
  }
  func.func @transform_2(%arg0: i32, %arg1: i32, %arg2: i32) -> (i32, i32) {
    %c0_i32 = arith.constant 0 : i32
    return %arg0, %arg1 : i32, i32
  }
}

module attributes {stable_mosaic.version = 11 : i64} {
  func.func @_linear_bias_kernel(%arg0: i32, %arg1: i32, %arg2: i32, %arg3: memref<16x256xf32, #tpu.memory_space<vmem>>, %arg4: memref<256x256xf32, #tpu.memory_space<vmem>>, %arg5: memref<1x256xf32, #tpu.memory_space<vmem>>, %arg6: memref<16x256xf32, #tpu.memory_space<vmem>>, %arg7: memref<16x256xf32, #tpu.memory_space<vmem>>) attributes {dimension_semantics = [#tpu.dimension_semantics<parallel>, #tpu.dimension_semantics<parallel>, #tpu.dimension_semantics<arbitrary>], iteration_bounds = array<i64: 1, 1, 1>, scalar_prefetch = 0 : i64, scratch_operands = 1 : i64, tpu.core_type = #tpu.core_type<tc>, window_params = [{transform_indices = @transform_0, window_bounds = array<i64: 16, 256>}, {transform_indices = @transform_1, window_bounds = array<i64: 256, 256>}, {transform_indices = @transform_2, window_bounds = array<i64: 1, 256>}, {transform_indices = @transform_3, window_bounds = array<i64: 16, 256>}]} {
    %c0_i32 = arith.constant 0 : i32
    %0 = arith.cmpi eq, %arg2, %c0_i32 : i32
    %1 = arith.extui %0 : i1 to i32
    %c0_i32_0 = arith.constant 0 : i32
    %2 = arith.cmpi ne, %1, %c0_i32_0 : i32
    scf.if %2 {
      %cst_10 = arith.constant 0.000000e+00 : f32
      %12 = vector.broadcast %cst_10 : f32 to vector<16x256xf32>
      %c0_11 = arith.constant 0 : index
      %c0_12 = arith.constant 0 : index
      %13 = vector.load %arg7[%c0_11, %c0_12] : memref<16x256xf32, #tpu.memory_space<vmem>>, vector<16x256xf32>
      tpu.vector_store %arg7[%c0_11, %c0_12], %12 {strides = array<i32>} : memref<16x256xf32, #tpu.memory_space<vmem>>, vector<16x256xf32>,
    } else {
    }
    %c0 = arith.constant 0 : index
    %c0_1 = arith.constant 0 : index
    %3 = vector.load %arg7[%c0, %c0_1] : memref<16x256xf32, #tpu.memory_space<vmem>>, vector<16x256xf32>
    %c0_2 = arith.constant 0 : index
    %c0_3 = arith.constant 0 : index
    %4 = vector.load %arg3[%c0_2, %c0_3] : memref<16x256xf32, #tpu.memory_space<vmem>>, vector<16x256xf32>
    %c0_4 = arith.constant 0 : index
    %c0_5 = arith.constant 0 : index
    %5 = vector.load %arg4[%c0_4, %c0_5] : memref<256x256xf32, #tpu.memory_space<vmem>>, vector<256x256xf32>
    %cst = arith.constant dense<0.000000e+00> : vector<16x256xf32>
    %6 = tpu.matmul %4, %5, %cst {dimension_numbers = #tpu.dot_dimension_numbers<[1], [0], [0], [1], [0, 0, 1, 1], [], []>} : vector<16x256xf32>, vector<256x256xf32>, vector<16x256xf32> -> vector<16x256xf32>
    %7 = arith.addf %3, %6 : vector<16x256xf32>
    %c0_6 = arith.constant 0 : index
    %c0_7 = arith.constant 0 : index
    %8 = vector.load %arg7[%c0_6, %c0_7] : memref<16x256xf32, #tpu.memory_space<vmem>>, vector<16x256xf32>
    tpu.vector_store %arg7[%c0_6, %c0_7], %7 {strides = array<i32>} : memref<16x256xf32, #tpu.memory_space<vmem>>, vector<16x256xf32>,
    %c0_i32_8 = arith.constant 0 : i32
    %9 = arith.cmpi eq, %arg2, %c0_i32_8 : i32
    %10 = arith.extui %9 : i1 to i32
    %c0_i32_9 = arith.constant 0 : i32
    %11 = arith.cmpi ne, %10, %c0_i32_9 : i32
    scf.if %11 {
      %c0_10 = arith.constant 0 : index
      %c0_11 = arith.constant 0 : index
      %12 = vector.load %arg7[%c0_10, %c0_11] : memref<16x256xf32, #tpu.memory_space<vmem>>, vector<16x256xf32>
      %c0_12 = arith.constant 0 : index
      %c0_13 = arith.constant 0 : index
      %13 = vector.load %arg5[%c0_12, %c0_13] : memref<1x256xf32, #tpu.memory_space<vmem>>, vector<1x256xf32>
      %14 = vector.broadcast %13 : vector<1x256xf32> to vector<16x256xf32>
      %15 = arith.addf %12, %14 : vector<16x256xf32>
      %c0_14 = arith.constant 0 : index
      %c0_15 = arith.constant 0 : index
      %16 = vector.load %arg6[%c0_14, %c0_15] : memref<16x256xf32, #tpu.memory_space<vmem>>, vector<16x256xf32>
      tpu.vector_store %arg6[%c0_14, %c0_15], %15 {strides = array<i32>} : memref<16x256xf32, #tpu.memory_space<vmem>>, vector<16x256xf32>,
    } else {
    }
    return
  }
  func.func @transform_0(%arg0: i32, %arg1: i32, %arg2: i32) -> (i32, i32) {
    %c0_i32 = arith.constant 0 : i32
    return %arg0, %arg2 : i32, i32
  }
  func.func @transform_1(%arg0: i32, %arg1: i32, %arg2: i32) -> (i32, i32) {
    %c0_i32 = arith.constant 0 : i32
    return %arg2, %arg1 : i32, i32
  }
  func.func @transform_2(%arg0: i32, %arg1: i32, %arg2: i32) -> (i32, i32) {
    %c0_i32 = arith.constant 0 : i32
    %c0_i32_0 = arith.constant 0 : i32
    return %c0_i32, %arg1 : i32, i32
  }
  func.func @transform_3(%arg0: i32, %arg1: i32, %arg2: i32) -> (i32, i32) {
    %c0_i32 = arith.constant 0 : i32
    return %arg0, %arg1 : i32, i32
  }
}

module attributes {stable_mosaic.version = 11 : i64} {
  func.func @_kv_proj_rope_kernel(%arg0: i32, %arg1: i32, %arg2: i32, %arg3: memref<16x256xf32, #tpu.memory_space<vmem>>, %arg4: memref<1x256x128xf32, #tpu.memory_space<vmem>>, %arg5: memref<1x1x128xf32, #tpu.memory_space<vmem>>, %arg6: memref<16x64xf32, #tpu.memory_space<vmem>>, %arg7: memref<16x64xf32, #tpu.memory_space<vmem>>, %arg8: memref<1x16x128xf32, #tpu.memory_space<vmem>>, %arg9: memref<16x128xf32, #tpu.memory_space<vmem>>) attributes {dimension_semantics = [#tpu.dimension_semantics<parallel>, #tpu.dimension_semantics<parallel>, #tpu.dimension_semantics<arbitrary>], iteration_bounds = array<i64: 2, 1, 1>, scalar_prefetch = 0 : i64, scratch_operands = 1 : i64, tpu.core_type = #tpu.core_type<tc>, window_params = [{transform_indices = @transform_0, window_bounds = array<i64: 16, 256>}, {transform_indices = @transform_1, window_bounds = array<i64: 1, 256, 128>}, {transform_indices = @transform_2, window_bounds = array<i64: 1, 1, 128>}, {transform_indices = @transform_3, window_bounds = array<i64: 16, 64>}, {transform_indices = @transform_4, window_bounds = array<i64: 16, 64>}, {transform_indices = @transform_5, window_bounds = array<i64: 1, 16, 128>}]} {
    %c0_i32 = arith.constant 0 : i32
    %0 = arith.cmpi eq, %arg2, %c0_i32 : i32
    %1 = arith.extui %0 : i1 to i32
    %c0_i32_0 = arith.constant 0 : i32
    %2 = arith.cmpi ne, %1, %c0_i32_0 : i32
    scf.if %2 {
      %cst_11 = arith.constant 0.000000e+00 : f32
      %13 = vector.broadcast %cst_11 : f32 to vector<16x128xf32>
      %c0_12 = arith.constant 0 : index
      %c0_13 = arith.constant 0 : index
      %14 = vector.load %arg9[%c0_12, %c0_13] : memref<16x128xf32, #tpu.memory_space<vmem>>, vector<16x128xf32>
      tpu.vector_store %arg9[%c0_12, %c0_13], %13 {strides = array<i32>} : memref<16x128xf32, #tpu.memory_space<vmem>>, vector<16x128xf32>,
    } else {
    }
    %c0 = arith.constant 0 : index
    %c0_1 = arith.constant 0 : index
    %3 = vector.load %arg9[%c0, %c0_1] : memref<16x128xf32, #tpu.memory_space<vmem>>, vector<16x128xf32>
    %c0_2 = arith.constant 0 : index
    %c0_3 = arith.constant 0 : index
    %4 = vector.load %arg3[%c0_2, %c0_3] : memref<16x256xf32, #tpu.memory_space<vmem>>, vector<16x256xf32>
    %c0_4 = arith.constant 0 : index
    %c0_5 = arith.constant 0 : index
    %c0_6 = arith.constant 0 : index
    %5 = vector.load %arg4[%c0_4, %c0_5, %c0_6] : memref<1x256x128xf32, #tpu.memory_space<vmem>>, vector<1x256x128xf32>
    %6 = vector.shape_cast %5 : vector<1x256x128xf32> to vector<256x128xf32>
    %cst = arith.constant dense<0.000000e+00> : vector<16x128xf32>
    %7 = tpu.matmul %4, %6, %cst {dimension_numbers = #tpu.dot_dimension_numbers<[1], [0], [0], [1], [0, 0, 1, 1], [], []>} : vector<16x256xf32>, vector<256x128xf32>, vector<16x128xf32> -> vector<16x128xf32>
    %8 = arith.addf %3, %7 : vector<16x128xf32>
    %c0_7 = arith.constant 0 : index
    %c0_8 = arith.constant 0 : index
    %9 = vector.load %arg9[%c0_7, %c0_8] : memref<16x128xf32, #tpu.memory_space<vmem>>, vector<16x128xf32>
    tpu.vector_store %arg9[%c0_7, %c0_8], %8 {strides = array<i32>} : memref<16x128xf32, #tpu.memory_space<vmem>>, vector<16x128xf32>,
    %c0_i32_9 = arith.constant 0 : i32
    %10 = arith.cmpi eq, %arg2, %c0_i32_9 : i32
    %11 = arith.extui %10 : i1 to i32
    %c0_i32_10 = arith.constant 0 : i32
    %12 = arith.cmpi ne, %11, %c0_i32_10 : i32
    scf.if %12 {
      %c0_11 = arith.constant 0 : index
      %c0_12 = arith.constant 0 : index
      %13 = vector.load %arg9[%c0_11, %c0_12] : memref<16x128xf32, #tpu.memory_space<vmem>>, vector<16x128xf32>
      %c0_13 = arith.constant 0 : index
      %c0_14 = arith.constant 0 : index
      %c0_15 = arith.constant 0 : index
      %14 = vector.load %arg5[%c0_13, %c0_14, %c0_15] : memref<1x1x128xf32, #tpu.memory_space<vmem>>, vector<1x1x128xf32>
      %15 = vector.shape_cast %14 : vector<1x1x128xf32> to vector<1x128xf32>
      %16 = vector.broadcast %15 : vector<1x128xf32> to vector<16x128xf32>
      %17 = arith.addf %13, %16 : vector<16x128xf32>
      %18 = vector.extract_strided_slice %17 {offsets = [0, 0], sizes = [16, 64], strides = [1, 1]} : vector<16x128xf32> to vector<16x64xf32>
      %19 = vector.extract_strided_slice %17 {offsets = [0, 64], sizes = [16, 64], strides = [1, 1]} : vector<16x128xf32> to vector<16x64xf32>
      %c0_16 = arith.constant 0 : index
      %c0_17 = arith.constant 0 : index
      %20 = vector.load %arg6[%c0_16, %c0_17] : memref<16x64xf32, #tpu.memory_space<vmem>>, vector<16x64xf32>
      %c0_18 = arith.constant 0 : index
      %c0_19 = arith.constant 0 : index
      %21 = vector.load %arg7[%c0_18, %c0_19] : memref<16x64xf32, #tpu.memory_space<vmem>>, vector<16x64xf32>
      %22 = arith.mulf %18, %20 : vector<16x64xf32>
      %23 = vector.extract_strided_slice %18 {offsets = [0, 32], sizes = [16, 32], strides = [1, 1]} : vector<16x64xf32> to vector<16x32xf32>
      %cst_20 = arith.constant 0.000000e+00 : f32
      %24 = vector.broadcast %cst_20 : f32 to vector<16x32xf32>
      %25 = arith.subf %24, %23 : vector<16x32xf32>
      %26 = vector.extract_strided_slice %18 {offsets = [0, 0], sizes = [16, 32], strides = [1, 1]} : vector<16x64xf32> to vector<16x32xf32>
      %27 = tpu.concatenate %25, %26 in 1 : vector<16x32xf32>, vector<16x32xf32> -> vector<16x64xf32>
      %28 = arith.mulf %27, %21 : vector<16x64xf32>
      %29 = arith.addf %22, %28 : vector<16x64xf32>
      %30 = tpu.concatenate %29, %19 in 1 : vector<16x64xf32>, vector<16x64xf32> -> vector<16x128xf32>
      %c0_21 = arith.constant 0 : index
      %c0_22 = arith.constant 0 : index
      %c0_23 = arith.constant 0 : index
      %31 = vector.load %arg8[%c0_21, %c0_22, %c0_23] : memref<1x16x128xf32, #tpu.memory_space<vmem>>, vector<1x16x128xf32>
      %32 = vector.shape_cast %31 : vector<1x16x128xf32> to vector<16x128xf32>
      %33 = vector.shape_cast %30 : vector<16x128xf32> to vector<1x16x128xf32>
      tpu.vector_store %arg8[%c0_21, %c0_22, %c0_23], %33 {strides = array<i32>} : memref<1x16x128xf32, #tpu.memory_space<vmem>>, vector<1x16x128xf32>,
    } else {
    }
    return
  }
  func.func @transform_0(%arg0: i32, %arg1: i32, %arg2: i32) -> (i32, i32) {
    %c0_i32 = arith.constant 0 : i32
    return %arg1, %arg2 : i32, i32
  }
  func.func @transform_1(%arg0: i32, %arg1: i32, %arg2: i32) -> (i32, i32, i32) {
    %c0_i32 = arith.constant 0 : i32
    %c0_i32_0 = arith.constant 0 : i32
    return %arg0, %arg2, %c0_i32 : i32, i32, i32
  }
  func.func @transform_2(%arg0: i32, %arg1: i32, %arg2: i32) -> (i32, i32, i32) {
    %c0_i32 = arith.constant 0 : i32
    %c0_i32_0 = arith.constant 0 : i32
    %c0_i32_1 = arith.constant 0 : i32
    return %arg0, %c0_i32, %c0_i32_0 : i32, i32, i32
  }
  func.func @transform_3(%arg0: i32, %arg1: i32, %arg2: i32) -> (i32, i32) {
    %c0_i32 = arith.constant 0 : i32
    %c0_i32_0 = arith.constant 0 : i32
    return %arg1, %c0_i32 : i32, i32
  }
  func.func @transform_4(%arg0: i32, %arg1: i32, %arg2: i32) -> (i32, i32) {
    %c0_i32 = arith.constant 0 : i32
    %c0_i32_0 = arith.constant 0 : i32
    return %arg1, %c0_i32 : i32, i32
  }
  func.func @transform_5(%arg0: i32, %arg1: i32, %arg2: i32) -> (i32, i32, i32) {
    %c0_i32 = arith.constant 0 : i32
    %c0_i32_0 = arith.constant 0 : i32
    return %arg0, %arg1, %c0_i32 : i32, i32, i32
  }
}

module attributes {stable_mosaic.version = 11 : i64} {
  func.func @_flash_gqa_kernel(%arg0: i32, %arg1: i32, %arg2: i32, %arg3: i32, %arg4: memref<1x8x128xf32, #tpu.memory_space<vmem>>, %arg5: memref<1x1x8x128xf32, #tpu.memory_space<vmem>>, %arg6: memref<1x8x64xf32, #tpu.memory_space<vmem>>, %arg7: memref<1x8x64xf32, #tpu.memory_space<vmem>>, %arg8: memref<1x8x128xf32, #tpu.memory_space<vmem>>, %arg9: memref<16x64xf32, #tpu.memory_space<vmem>>, %arg10: memref<16x1xf32, #tpu.memory_space<vmem>>, %arg11: memref<16x1xf32, #tpu.memory_space<vmem>>, %arg12: memref<16x64xf32, #tpu.memory_space<vmem>>) attributes {dimension_semantics = [#tpu.dimension_semantics<parallel>, #tpu.dimension_semantics<parallel>, #tpu.dimension_semantics<parallel>, #tpu.dimension_semantics<arbitrary>], iteration_bounds = array<i64: 2, 2, 1, 1>, scalar_prefetch = 0 : i64, scratch_operands = 4 : i64, tpu.core_type = #tpu.core_type<tc>, window_params = [{transform_indices = @transform_0, window_bounds = array<i64: 1, 8, 128>}, {transform_indices = @transform_1, window_bounds = array<i64: 1, 1, 8, 128>}, {transform_indices = @transform_2, window_bounds = array<i64: 1, 8, 64>}, {transform_indices = @transform_3, window_bounds = array<i64: 1, 8, 64>}, {transform_indices = @transform_4, window_bounds = array<i64: 1, 8, 128>}]} {
    %c0_i32 = arith.constant 0 : i32
    %0 = arith.cmpi eq, %arg3, %c0_i32 : i32
    %1 = arith.extui %0 : i1 to i32
    %c0_i32_0 = arith.constant 0 : i32
    %2 = arith.cmpi ne, %1, %c0_i32_0 : i32
    scf.if %2 {
      %cst_26 = arith.constant 0xFF800000 : f32
      %34 = vector.broadcast %cst_26 : f32 to vector<16x1xf32>
      %c0_27 = arith.constant 0 : index
      %c0_28 = arith.constant 0 : index
      %35 = vector.load %arg10[%c0_27, %c0_28] : memref<16x1xf32, #tpu.memory_space<vmem>>, vector<16x1xf32>
      tpu.vector_store %arg10[%c0_27, %c0_28], %34 {strides = array<i32>} : memref<16x1xf32, #tpu.memory_space<vmem>>, vector<16x1xf32>,
      %cst_29 = arith.constant 0.000000e+00 : f32
      %36 = vector.broadcast %cst_29 : f32 to vector<16x1xf32>
      %c0_30 = arith.constant 0 : index
      %c0_31 = arith.constant 0 : index
      %37 = vector.load %arg11[%c0_30, %c0_31] : memref<16x1xf32, #tpu.memory_space<vmem>>, vector<16x1xf32>
      tpu.vector_store %arg11[%c0_30, %c0_31], %36 {strides = array<i32>} : memref<16x1xf32, #tpu.memory_space<vmem>>, vector<16x1xf32>,
      %cst_32 = arith.constant 0.000000e+00 : f32
      %38 = vector.broadcast %cst_32 : f32 to vector<16x64xf32>
      %c0_33 = arith.constant 0 : index
      %c0_34 = arith.constant 0 : index
      %39 = vector.load %arg12[%c0_33, %c0_34] : memref<16x64xf32, #tpu.memory_space<vmem>>, vector<16x64xf32>
      tpu.vector_store %arg12[%c0_33, %c0_34], %38 {strides = array<i32>} : memref<16x64xf32, #tpu.memory_space<vmem>>, vector<16x64xf32>,
      %c0_35 = arith.constant 0 : index
      %c0_36 = arith.constant 0 : index
      %c0_37 = arith.constant 0 : index
      %40 = vector.load %arg6[%c0_35, %c0_36, %c0_37] : memref<1x8x64xf32, #tpu.memory_space<vmem>>, vector<1x8x64xf32>
      %41 = vector.shape_cast %40 : vector<1x8x64xf32> to vector<8x64xf32>
      %c0_38 = arith.constant 0 : index
      %c0_39 = arith.constant 0 : index
      %c0_40 = arith.constant 0 : index
      %42 = vector.load %arg7[%c0_38, %c0_39, %c0_40] : memref<1x8x64xf32, #tpu.memory_space<vmem>>, vector<1x8x64xf32>
      %43 = vector.shape_cast %42 : vector<1x8x64xf32> to vector<8x64xf32>
      %c0_41 = arith.constant 0 : index
      %c0_42 = arith.constant 0 : index
      %c0_43 = arith.constant 0 : index
      %44 = vector.load %arg4[%c0_41, %c0_42, %c0_43] : memref<1x8x128xf32, #tpu.memory_space<vmem>>, vector<1x8x64xf32>
      %45 = vector.shape_cast %44 : vector<1x8x64xf32> to vector<8x64xf32>
      %46 = arith.mulf %45, %41 : vector<8x64xf32>
      %47 = vector.extract_strided_slice %45 {offsets = [0, 32], sizes = [8, 32], strides = [1, 1]} : vector<8x64xf32> to vector<8x32xf32>
      %cst_44 = arith.constant 0.000000e+00 : f32
      %48 = vector.broadcast %cst_44 : f32 to vector<8x32xf32>
      %49 = arith.subf %48, %47 : vector<8x32xf32>
      %50 = vector.extract_strided_slice %45 {offsets = [0, 0], sizes = [8, 32], strides = [1, 1]} : vector<8x64xf32> to vector<8x32xf32>
      %51 = tpu.concatenate %49, %50 in 1 : vector<8x32xf32>, vector<8x32xf32> -> vector<8x64xf32>
      %52 = arith.mulf %51, %43 : vector<8x64xf32>
      %53 = arith.addf %46, %52 : vector<8x64xf32>
      %cst_45 = arith.constant 1.250000e-01 : f32
      %54 = vector.broadcast %cst_45 : f32 to vector<8x64xf32>
      %55 = arith.mulf %53, %54 : vector<8x64xf32>
      %c0_46 = arith.constant 0 : index
      %c0_47 = arith.constant 0 : index
      %56 = vector.load %arg9[%c0_46, %c0_47] : memref<16x64xf32, #tpu.memory_space<vmem>>, vector<8x64xf32>
      tpu.vector_store %arg9[%c0_46, %c0_47], %55 {strides = array<i32>} : memref<16x64xf32, #tpu.memory_space<vmem>>, vector<8x64xf32>,
      %c0_48 = arith.constant 0 : index
      %c0_49 = arith.constant 0 : index
      %c64_50 = arith.constant 64 : index
      %57 = vector.load %arg4[%c0_48, %c0_49, %c64_50] : memref<1x8x128xf32, #tpu.memory_space<vmem>>, vector<1x8x64xf32>
      %58 = vector.shape_cast %57 : vector<1x8x64xf32> to vector<8x64xf32>
      %59 = arith.mulf %58, %41 : vector<8x64xf32>
      %60 = vector.extract_strided_slice %58 {offsets = [0, 32], sizes = [8, 32], strides = [1, 1]} : vector<8x64xf32> to vector<8x32xf32>
      %cst_51 = arith.constant 0.000000e+00 : f32
      %61 = vector.broadcast %cst_51 : f32 to vector<8x32xf32>
      %62 = arith.subf %61, %60 : vector<8x32xf32>
      %63 = vector.extract_strided_slice %58 {offsets = [0, 0], sizes = [8, 32], strides = [1, 1]} : vector<8x64xf32> to vector<8x32xf32>
      %64 = tpu.concatenate %62, %63 in 1 : vector<8x32xf32>, vector<8x32xf32> -> vector<8x64xf32>
      %65 = arith.mulf %64, %43 : vector<8x64xf32>
      %66 = arith.addf %59, %65 : vector<8x64xf32>
      %cst_52 = arith.constant 1.250000e-01 : f32
      %67 = vector.broadcast %cst_52 : f32 to vector<8x64xf32>
      %68 = arith.mulf %66, %67 : vector<8x64xf32>
      %c8 = arith.constant 8 : index
      %c0_53 = arith.constant 0 : index
      %69 = vector.load %arg9[%c8, %c0_53] : memref<16x64xf32, #tpu.memory_space<vmem>>, vector<8x64xf32>
      tpu.vector_store %arg9[%c8, %c0_53], %68 {strides = array<i32>} : memref<16x64xf32, #tpu.memory_space<vmem>>, vector<8x64xf32>,
    } else {
    }
    %c0 = arith.constant 0 : index
    %c0_1 = arith.constant 0 : index
    %c0_2 = arith.constant 0 : index
    %c0_3 = arith.constant 0 : index
    %3 = vector.load %arg5[%c0, %c0_1, %c0_2, %c0_3] : memref<1x1x8x128xf32, #tpu.memory_space<vmem>>, vector<1x1x8x64xf32>
    %4 = vector.shape_cast %3 : vector<1x1x8x64xf32> to vector<8x64xf32>
    %c0_4 = arith.constant 0 : index
    %c0_5 = arith.constant 0 : index
    %c0_6 = arith.constant 0 : index
    %c64 = arith.constant 64 : index
    %5 = vector.load %arg5[%c0_4, %c0_5, %c0_6, %c64] : memref<1x1x8x128xf32, #tpu.memory_space<vmem>>, vector<1x1x8x64xf32>
    %6 = vector.shape_cast %5 : vector<1x1x8x64xf32> to vector<8x64xf32>
    %c0_7 = arith.constant 0 : index
    %c0_8 = arith.constant 0 : index
    %7 = vector.load %arg9[%c0_7, %c0_8] : memref<16x64xf32, #tpu.memory_space<vmem>>, vector<16x64xf32>
    %cst = arith.constant dense<0.000000e+00> : vector<16x8xf32>
    %8 = tpu.matmul %7, %4, %cst {dimension_numbers = #tpu.dot_dimension_numbers<[1], [1], [0], [0], [0, 0, 1, 0], [], []>} : vector<16x64xf32>, vector<8x64xf32>, vector<16x8xf32> -> vector<16x8xf32>
    %c0_9 = arith.constant 0 : index
    %c0_10 = arith.constant 0 : index
    %9 = vector.load %arg10[%c0_9, %c0_10] : memref<16x1xf32, #tpu.memory_space<vmem>>, vector<16x1xf32>
    %cst_11 = arith.constant dense<0xFF800000> : vector<16xf32>
    %10 = vector.multi_reduction <maximumf>, %8, %cst_11 [1] : vector<16x8xf32> to vector<16xf32>
    %11 = vector.shape_cast %10 : vector<16xf32> to vector<16x1xf32>
    %12 = arith.maximumf %9, %11 : vector<16x1xf32>
    %13 = arith.subf %9, %12 : vector<16x1xf32>
    %14 = math.exp %13 : vector<16x1xf32>
    %15 = vector.broadcast %12 : vector<16x1xf32> to vector<16x8xf32>
    %16 = arith.subf %8, %15 : vector<16x8xf32>
    %17 = math.exp %16 : vector<16x8xf32>
    %c0_12 = arith.constant 0 : index
    %c0_13 = arith.constant 0 : index
    %18 = vector.load %arg11[%c0_12, %c0_13] : memref<16x1xf32, #tpu.memory_space<vmem>>, vector<16x1xf32>
    %19 = arith.mulf %14, %18 : vector<16x1xf32>
    %cst_14 = arith.constant dense<0.000000e+00> : vector<16xf32>
    %20 = vector.multi_reduction <add>, %17, %cst_14 [1] : vector<16x8xf32> to vector<16xf32>
    %21 = vector.shape_cast %20 : vector<16xf32> to vector<16x1xf32>
    %22 = arith.addf %19, %21 : vector<16x1xf32>
    %c0_15 = arith.constant 0 : index
    %c0_16 = arith.constant 0 : index
    %23 = vector.load %arg11[%c0_15, %c0_16] : memref<16x1xf32, #tpu.memory_space<vmem>>, vector<16x1xf32>
    tpu.vector_store %arg11[%c0_15, %c0_16], %22 {strides = array<i32>} : memref<16x1xf32, #tpu.memory_space<vmem>>, vector<16x1xf32>,
    %c0_17 = arith.constant 0 : index
    %c0_18 = arith.constant 0 : index
    %24 = vector.load %arg12[%c0_17, %c0_18] : memref<16x64xf32, #tpu.memory_space<vmem>>, vector<16x64xf32>
    %25 = vector.broadcast %14 : vector<16x1xf32> to vector<16x64xf32>
    %26 = arith.mulf %25, %24 : vector<16x64xf32>
    %cst_19 = arith.constant dense<0.000000e+00> : vector<16x64xf32>
    %27 = tpu.matmul %17, %6, %cst_19 {dimension_numbers = #tpu.dot_dimension_numbers<[1], [0], [0], [1], [0, 0, 1, 1], [], []>} : vector<16x8xf32>, vector<8x64xf32>, vector<16x64xf32> -> vector<16x64xf32>
    %28 = arith.addf %26, %27 : vector<16x64xf32>
    %c0_20 = arith.constant 0 : index
    %c0_21 = arith.constant 0 : index
    %29 = vector.load %arg12[%c0_20, %c0_21] : memref<16x64xf32, #tpu.memory_space<vmem>>, vector<16x64xf32>
    tpu.vector_store %arg12[%c0_20, %c0_21], %28 {strides = array<i32>} : memref<16x64xf32, #tpu.memory_space<vmem>>, vector<16x64xf32>,
    %c0_22 = arith.constant 0 : index
    %c0_23 = arith.constant 0 : index
    %30 = vector.load %arg10[%c0_22, %c0_23] : memref<16x1xf32, #tpu.memory_space<vmem>>, vector<16x1xf32>
    tpu.vector_store %arg10[%c0_22, %c0_23], %12 {strides = array<i32>} : memref<16x1xf32, #tpu.memory_space<vmem>>, vector<16x1xf32>,
    %c0_i32_24 = arith.constant 0 : i32
    %31 = arith.cmpi eq, %arg3, %c0_i32_24 : i32
    %32 = arith.extui %31 : i1 to i32
    %c0_i32_25 = arith.constant 0 : i32
    %33 = arith.cmpi ne, %32, %c0_i32_25 : i32
    scf.if %33 {
      %c0_26 = arith.constant 0 : index
      %c0_27 = arith.constant 0 : index
      %34 = vector.load %arg11[%c0_26, %c0_27] : memref<16x1xf32, #tpu.memory_space<vmem>>, vector<16x1xf32>
      %35 = tpu.reciprocal %34 : vector<16x1xf32> -> vector<16x1xf32>
      %c0_28 = arith.constant 0 : index
      %c0_29 = arith.constant 0 : index
      %36 = vector.load %arg12[%c0_28, %c0_29] : memref<16x64xf32, #tpu.memory_space<vmem>>, vector<16x64xf32>
      %37 = vector.broadcast %35 : vector<16x1xf32> to vector<16x64xf32>
      %38 = arith.mulf %36, %37 : vector<16x64xf32>
      %39 = vector.extract_strided_slice %38 {offsets = [0, 0], sizes = [8, 64], strides = [1, 1]} : vector<16x64xf32> to vector<8x64xf32>
      %c0_30 = arith.constant 0 : index
      %c0_31 = arith.constant 0 : index
      %c0_32 = arith.constant 0 : index
      %40 = vector.load %arg8[%c0_30, %c0_31, %c0_32] : memref<1x8x128xf32, #tpu.memory_space<vmem>>, vector<1x8x64xf32>
      %41 = vector.shape_cast %40 : vector<1x8x64xf32> to vector<8x64xf32>
      %42 = vector.shape_cast %39 : vector<8x64xf32> to vector<1x8x64xf32>
      tpu.vector_store %arg8[%c0_30, %c0_31, %c0_32], %42 {strides = array<i32>} : memref<1x8x128xf32, #tpu.memory_space<vmem>>, vector<1x8x64xf32>,
      %43 = vector.extract_strided_slice %38 {offsets = [8, 0], sizes = [8, 64], strides = [1, 1]} : vector<16x64xf32> to vector<8x64xf32>
      %c0_33 = arith.constant 0 : index
      %c0_34 = arith.constant 0 : index
      %c64_35 = arith.constant 64 : index
      %44 = vector.load %arg8[%c0_33, %c0_34, %c64_35] : memref<1x8x128xf32, #tpu.memory_space<vmem>>, vector<1x8x64xf32>
      %45 = vector.shape_cast %44 : vector<1x8x64xf32> to vector<8x64xf32>
      %46 = vector.shape_cast %43 : vector<8x64xf32> to vector<1x8x64xf32>
      tpu.vector_store %arg8[%c0_33, %c0_34, %c64_35], %46 {strides = array<i32>} : memref<1x8x128xf32, #tpu.memory_space<vmem>>, vector<1x8x64xf32>,
    } else {
    }
    return
  }
  func.func @transform_0(%arg0: i32, %arg1: i32, %arg2: i32, %arg3: i32) -> (i32, i32, i32) {
    %c0_i32 = arith.constant 0 : i32
    return %arg0, %arg2, %arg1 : i32, i32, i32
  }
  func.func @transform_1(%arg0: i32, %arg1: i32, %arg2: i32, %arg3: i32) -> (i32, i32, i32, i32) {
    %c0_i32 = arith.constant 0 : i32
    %c0_i32_0 = arith.constant 0 : i32
    return %arg1, %arg0, %arg3, %c0_i32 : i32, i32, i32, i32
  }
  func.func @transform_2(%arg0: i32, %arg1: i32, %arg2: i32, %arg3: i32) -> (i32, i32, i32) {
    %c0_i32 = arith.constant 0 : i32
    %c0_i32_0 = arith.constant 0 : i32
    return %arg0, %arg2, %c0_i32 : i32, i32, i32
  }
  func.func @transform_3(%arg0: i32, %arg1: i32, %arg2: i32, %arg3: i32) -> (i32, i32, i32) {
    %c0_i32 = arith.constant 0 : i32
    %c0_i32_0 = arith.constant 0 : i32
    return %arg0, %arg2, %c0_i32 : i32, i32, i32
  }
  func.func @transform_4(%arg0: i32, %arg1: i32, %arg2: i32, %arg3: i32) -> (i32, i32, i32) {
    %c0_i32 = arith.constant 0 : i32
    return %arg0, %arg2, %arg1 : i32, i32, i32
  }
}

</mosaic_0001>

<llo_original>
// kernel: attention_forward.7
$region0: #{attention_forward.7}
  #allocation0 [shape = 'u32[]', space=smem, size = 0x4, offset = 0x4, fixed_abs, tag = 'smem constant byte address 0x4 - core index']
  #allocation1 [shape = 'u32[144,128]{1,0:T(1,128)}', space=vmem, size = 0x12000, scoped, tag = 'internal scratch']
  #allocation2 [shape = 'f32[16,256]{1,0:T(8,128)}', space=vmem, size = 0x4000, scoped, tag = 'scratch operand']
  %s0 = inlined_call_operand.vmem [shape: f32[16,256], index: 0, kind: input, shape index: {}]
  %s1 = inlined_call_operand.vmem [shape: f32[256,256], index: 1, kind: input, shape index: {}]
  %s2 = inlined_call_operand.hbm [shape: f32[16,256], index: 2, kind: output, shape index: {}]
  %s3 = sld [smem:[#allocation0]]
  $region26: #{attention_forward.7} parent=0
    _
  %s5 = ssub.s32 1, %s3
  %s6 = scalar_select 0, %s5, %s3
  $region1: #{attention_forward.7} parent=0
    #allocation3 [shape = 'u8[16384]{0}', space=vmem, size = 0x4000, scoped, tag = 'output window, operand 0, single buffered']
    #allocation4 [shape = 's32[1]{0}', space=sflag, size = 0x4, scoped, tag = 'scoped memory for attention_forward.7']
    %7 = vsyncpa [#allocation4], 0
    // Predicated region
    $region2: #{attention_forward.7} parent=1 // pred_check
      _
    $region3: #{attention_forward.7} parent=1 // pred_check_branch
      %9 = sbr.rel (0) target = $region5
    $region4: #{attention_forward.7} parent=1 // pred_region
      _
    $region5: #{attention_forward.7} parent=1 // pred_fallthru
      _
    // Predicated region
    $region6: #{attention_forward.7} parent=1 // pred_check
      _
    $region7: #{attention_forward.7} parent=1 // pred_check_branch
      %11 = sbr.rel (0) target = $region9
    $region8: #{attention_forward.7} parent=1 // pred_region
      _
    $region9: #{attention_forward.7} parent=1 // pred_fallthru
      _
    %p12 = scmp.eq.s32.totalorder 0, 0
    // Predicated region
    $region10: #{attention_forward.7} parent=1 // pred_check
      %p13 = pneg %p12
    $region11: #{attention_forward.7} parent=1 // pred_check_branch
      %15 = sbr.rel (%p13) target = $region13
    $region12: #{attention_forward.7} parent=1 // pred_region
      %16 = vst [vmem:[#allocation2] sm:$0xff] 0.0
      %17 = vst [vmem:[#allocation2 + $0x8] sm:$0xff] 0.0
      %18 = vst [vmem:[#allocation2 + $0x10] sm:$0xff] 0.0
      %19 = vst [vmem:[#allocation2 + $0x18] sm:$0xff] 0.0
    $region13: #{attention_forward.7} parent=1 // pred_fallthru
      _
    %v20 = vld [vmem:[#allocation2] sm:$0xff]
    %v21 = vld [vmem:[#allocation2 + $0x8] sm:$0xff]
    %v22 = vld [vmem:[#allocation2 + $0x10] sm:$0xff]
    %v23 = vld [vmem:[#allocation2 + $0x18] sm:$0xff]
    %v24 = vld [vmem:[%s0] sm:$0xff]
    %v25 = vld [vmem:[%s0 + $0x8] sm:$0xff]
    %v26 = vld [vmem:[%s0 + $0x10] sm:$0xff]
    %v27 = vld [vmem:[%s0 + $0x18] sm:$0xff]
    %v28 = vld [vmem:[%s1] sm:$0xff]
    %v29 = vld [vmem:[%s1 + $0x8] sm:$0xff]
    %v30 = vld [vmem:[%s1 + $0x10] sm:$0xff]
    %v31 = vld [vmem:[%s1 + $0x18] sm:$0xff]
    %v32 = vld [vmem:[%s1 + $0x20] sm:$0xff]
    %v33 = vld [vmem:[%s1 + $0x28] sm:$0xff]
    %v34 = vld [vmem:[%s1 + $0x30] sm:$0xff]
    %v35 = vld [vmem:[%s1 + $0x38] sm:$0xff]
    %v36 = vld [vmem:[%s1 + $0x40] sm:$0xff]
    %v37 = vld [vmem:[%s1 + $0x48] sm:$0xff]
    %v38 = vld [vmem:[%s1 + $0x50] sm:$0xff]
    %v39 = vld [vmem:[%s1 + $0x58] sm:$0xff]
    %v40 = vld [vmem:[%s1 + $0x60] sm:$0xff]
    %v41 = vld [vmem:[%s1 + $0x68] sm:$0xff]
    %v42 = vld [vmem:[%s1 + $0x70] sm:$0xff]
    %v43 = vld [vmem:[%s1 + $0x78] sm:$0xff]
    %v44 = vld [vmem:[%s1 + $0x80] sm:$0xff]
    %v45 = vld [vmem:[%s1 + $0x88] sm:$0xff]
    %v46 = vld [vmem:[%s1 + $0x90] sm:$0xff]
    %v47 = vld [vmem:[%s1 + $0x98] sm:$0xff]
    %v48 = vld [vmem:[%s1 + $0xa0] sm:$0xff]
    %v49 = vld [vmem:[%s1 + $0xa8] sm:$0xff]
    %v50 = vld [vmem:[%s1 + $0xb0] sm:$0xff]
    %v51 = vld [vmem:[%s1 + $0xb8] sm:$0xff]
    %v52 = vld [vmem:[%s1 + $0xc0] sm:$0xff]
    %v53 = vld [vmem:[%s1 + $0xc8] sm:$0xff]
    %v54 = vld [vmem:[%s1 + $0xd0] sm:$0xff]
    %v55 = vld [vmem:[%s1 + $0xd8] sm:$0xff]
    %v56 = vld [vmem:[%s1 + $0xe0] sm:$0xff]
    %v57 = vld [vmem:[%s1 + $0xe8] sm:$0xff]
    %v58 = vld [vmem:[%s1 + $0xf0] sm:$0xff]
    %v59 = vld [vmem:[%s1 + $0xf8] sm:$0xff]
    %v60 = vld [vmem:[%s1 + $0x100] sm:$0xff]
    %v61 = vld [vmem:[%s1 + $0x108] sm:$0xff]
    %v62 = vld [vmem:[%s1 + $0x110] sm:$0xff]
    %v63 = vld [vmem:[%s1 + $0x118] sm:$0xff]
    %v64 = vld [vmem:[%s1 + $0x120] sm:$0xff]
    %v65 = vld [vmem:[%s1 + $0x128] sm:$0xff]
    %v66 = vld [vmem:[%s1 + $0x130] sm:$0xff]
    %v67 = vld [vmem:[%s1 + $0x138] sm:$0xff]
    %v68 = vld [vmem:[%s1 + $0x140] sm:$0xff]
    %v69 = vld [vmem:[%s1 + $0x148] sm:$0xff]
    %v70 = vld [vmem:[%s1 + $0x150] sm:$0xff]
    %v71 = vld [vmem:[%s1 + $0x158] sm:$0xff]
    %v72 = vld [vmem:[%s1 + $0x160] sm:$0xff]
    %v73 = vld [vmem:[%s1 + $0x168] sm:$0xff]
    %v74 = vld [vmem:[%s1 + $0x170] sm:$0xff]
    %v75 = vld [vmem:[%s1 + $0x178] sm:$0xff]
    %v76 = vld [vmem:[%s1 + $0x180] sm:$0xff]
    %v77 = vld [vmem:[%s1 + $0x188] sm:$0xff]
    %v78 = vld [vmem:[%s1 + $0x190] sm:$0xff]
    %v79 = vld [vmem:[%s1 + $0x198] sm:$0xff]
    %v80 = vld [vmem:[%s1 + $0x1a0] sm:$0xff]
    %v81 = vld [vmem:[%s1 + $0x1a8] sm:$0xff]
    %v82 = vld [vmem:[%s1 + $0x1b0] sm:$0xff]
    %v83 = vld [vmem:[%s1 + $0x1b8] sm:$0xff]
    %v84 = vld [vmem:[%s1 + $0x1c0] sm:$0xff]
    %v85 = vld [vmem:[%s1 + $0x1c8] sm:$0xff]
    %v86 = vld [vmem:[%s1 + $0x1d0] sm:$0xff]
    %v87 = vld [vmem:[%s1 + $0x1d8] sm:$0xff]
    %v88 = vld [vmem:[%s1 + $0x1e0] sm:$0xff]
    %v89 = vld [vmem:[%s1 + $0x1e8] sm:$0xff]
    %v90 = vld [vmem:[%s1 + $0x1f0] sm:$0xff]
    %v91 = vld [vmem:[%s1 + $0x1f8] sm:$0xff]
    %92 = vmatprep.subr.mxu0 %v59
    %93 = vmatpush1.msra.mxu0 %v58
    %94 = vmatprep.subr.mxu0 %v57
    %95 = vmatpush1.msra.mxu0 %v56
    %96 = vmatprep.subr.mxu0 %v55
    %97 = vmatpush1.msra.mxu0 %v54
    %98 = vmatprep.subr.mxu0 %v53
    %99 = vmatpush1.msra.mxu0 %v52
    %100 = vmatprep.subr.mxu0 %v51
    %101 = vmatpush1.msra.mxu0 %v50
    %102 = vmatprep.subr.mxu0 %v49
    %103 = vmatpush1.msra.mxu0 %v48
    %104 = vmatprep.subr.mxu0 %v47
    %105 = vmatpush1.msra.mxu0 %v46
    %106 = vmatprep.subr.mxu0 %v45
    %107 = vmatpush1.msra.mxu0 %v44
    %108 = vmatprep.subr.mxu0 %v43
    %109 = vmatpush1.msra.mxu0 %v42
    %110 = vmatprep.subr.mxu0 %v41
    %111 = vmatpush1.msra.mxu0 %v40
    %112 = vmatprep.subr.mxu0 %v39
    %113 = vmatpush1.msra.mxu0 %v38
    %114 = vmatprep.subr.mxu0 %v37
    %115 = vmatpush1.msra.mxu0 %v36
    %116 = vmatprep.subr.mxu0 %v35
    %117 = vmatpush1.msra.mxu0 %v34
    %118 = vmatprep.subr.mxu0 %v33
    %119 = vmatpush1.msra.mxu0 %v32
    %120 = vmatprep.subr.mxu0 %v31
    %121 = vmatpush1.msra.mxu0 %v30
    %122 = vmatprep.subr.mxu0 %v29
    %123 = vmatpush1.msra.mxu0 %v28
    %124 = vmatprep.subr.mxu0 %v91
    %125 = vmatpush2.msra.mxu0 %v90
    %126 = vmatprep.subr.mxu0 %v89
    %127 = vmatpush2.msra.mxu0 %v88
    %128 = vmatprep.subr.mxu0 %v87
    %129 = vmatpush2.msra.mxu0 %v86
    %130 = vmatprep.subr.mxu0 %v85
    %131 = vmatpush2.msra.mxu0 %v84
    %132 = vmatprep.subr.mxu0 %v83
    %133 = vmatpush2.msra.mxu0 %v82
    %134 = vmatprep.subr.mxu0 %v81
    %135 = vmatpush2.msra.mxu0 %v80
    %136 = vmatprep.subr.mxu0 %v79
    %137 = vmatpush2.msra.mxu0 %v78
    %138 = vmatprep.subr.mxu0 %v77
    %139 = vmatpush2.msra.mxu0 %v76
    %140 = vmatprep.subr.mxu0 %v75
    %141 = vmatpush2.msra.mxu0 %v74
    %142 = vmatprep.subr.mxu0 %v73
    %143 = vmatpush2.msra.mxu0 %v72
    %144 = vmatprep.subr.mxu0 %v71
    %145 = vmatpush2.msra.mxu0 %v70
    %146 = vmatprep.subr.mxu0 %v69
    %147 = vmatpush2.msra.mxu0 %v68
    %148 = vmatprep.subr.mxu0 %v67
    %149 = vmatpush2.msra.mxu0 %v66
    %150 = vmatprep.subr.mxu0 %v65
    %151 = vmatpush2.msra.mxu0 %v64
    %152 = vmatprep.subr.mxu0 %v63
    %153 = vmatpush2.msra.mxu0 %v62
    %154 = vmatprep.subr.mxu0 %v61
    %155 = vmatpush2.msra.mxu0 %v60
    %156 = vmatprep.mubr.f32.mxu0 %v25
    %157 = vmatmul.mubr.f32.gmra.mxu0 %v24
    %v158 = vpop.f32.mrf.mxu0
    %v159 = vadd.f32 0.0, %v158
    %v160 = vpop.f32.mrf.mxu0
    %v161 = vadd.f32 0.0, %v160
    %162 = vmatprep.mubr.f32.mxu0 %v27
    %163 = vmatmul.mubr.f32.gmra.mxu0 %v26
    %v164 = vpop.f32.mrf.mxu0
    %v165 = vadd.f32 0.0, %v164
    %v166 = vpop.f32.mrf.mxu0
    %v167 = vadd.f32 0.0, %v166
    %168 = vdwg.mxu0
    %v169 = vadd.f32 %v20, %v159
    %v170 = vadd.f32 %v21, %v161
    %v171 = vadd.f32 %v22, %v165
    %v172 = vadd.f32 %v23, %v167
    %173 = vst [vmem:[#allocation2] sm:$0xff] %v169
    %174 = vst [vmem:[#allocation2 + $0x8] sm:$0xff] %v170
    %175 = vst [vmem:[#allocation2 + $0x10] sm:$0xff] %v171
    %176 = vst [vmem:[#allocation2 + $0x18] sm:$0xff] %v172
    // Predicated region
    $region14: #{attention_forward.7} parent=1 // pred_check
      %p177 = pneg %p12
    $region15: #{attention_forward.7} parent=1 // pred_check_branch
      %179 = sbr.rel (%p177) target = $region17
    $region16: #{attention_forward.7} parent=1 // pred_region
      %v180 = vld [vmem:[#allocation2] sm:$0xff]
      %v181 = vld [vmem:[#allocation2 + $0x8] sm:$0xff]
      %v182 = vld [vmem:[#allocation2 + $0x10] sm:$0xff]
      %v183 = vld [vmem:[#allocation2 + $0x18] sm:$0xff]
      %184 = vst [vmem:[#allocation3] sm:$0xff] %v180
      %185 = vst [vmem:[#allocation3 + $0x8] sm:$0xff] %v181
      %186 = vst [vmem:[#allocation3 + $0x10] sm:$0xff] %v182
      %187 = vst [vmem:[#allocation3 + $0x18] sm:$0xff] %v183
    $region17: #{attention_forward.7} parent=1 // pred_fallthru
      _
    // Predicated region
    $region18: #{attention_forward.7} parent=1 // pred_check
      _
    $region19: #{attention_forward.7} parent=1 // pred_check_branch
      %189 = sbr.rel (0) target = $region21
    $region20: #{attention_forward.7} parent=1 // pred_region
      %s191 = ssub.s32 512, 512
      %192 = vsyncadd [#allocation4], %s191
      %s193 = sshll.u32 [#allocation3], 4
      %s194 = int_to_ptr.vmem [resolvable:$true] %s193
      %199 = dma.vmem_to_hbm [thread:$0]  %s194, 512, %s2, [#allocation4], 256, 256, 16
    $region21: #{attention_forward.7} parent=1 // pred_fallthru
      _
    // Predicated region
    $region22: #{attention_forward.7} parent=1 // pred_check
      _
    $region23: #{attention_forward.7} parent=1 // pred_check_branch
      %201 = sbr.rel (0) target = $region25
    $region24: #{attention_forward.7} parent=1 // pred_region
      %202 = dma.done [#allocation4], 512
    $region25: #{attention_forward.7} parent=1 // pred_fallthru
      _
    %203 = vsyncpa [#allocation4], 1

// kernel: attention_forward.5
$region0: #{attention_forward.5}
  #allocation0 [shape = 'u32[]', space=smem, size = 0x4, offset = 0x4, fixed_abs, tag = 'smem constant byte address 0x4 - core index']
  #allocation1 [shape = 'u32[144,128]{1,0:T(1,128)}', space=vmem, size = 0x12000, scoped, tag = 'internal scratch']
  #allocation2 [shape = 'f32[16,128]{1,0:T(8,128)}', space=vmem, size = 0x2000, scoped, tag = 'scratch operand']
  %s0 = inlined_call_operand.hbm [shape: f32[16,256], index: 0, kind: input, shape index: {}]
  %s1 = inlined_call_operand.hbm [shape: f32[2,256,128], index: 1, kind: input, shape index: {}]
  %s2 = inlined_call_operand.hbm [shape: f32[2,1,128], index: 2, kind: input, shape index: {}]
  %s3 = inlined_call_operand.vmem [shape: f32[16,64], index: 3, kind: input, shape index: {}]
  %s4 = inlined_call_operand.vmem [shape: f32[16,64], index: 4, kind: input, shape index: {}]
  %s5 = inlined_call_operand.vmem [shape: f32[2,16,128], index: 5, kind: output, shape index: {}]
  %s6 = sld [smem:[#allocation0]]
  $region73: #{attention_forward.5} parent=0
    _
  %s8 = ssub.s32 1, %s6
  %s9 = scalar_select 0, %s8, %s6
  $region1: #{attention_forward.5} parent=0
    #allocation3 [shape = 'u8[16384]{0}', space=vmem, size = 0x4000, scoped, tag = 'input window, operand 0, single buffered']
    #allocation4 [shape = 's32[2]{0}', space=sflag, size = 0x8, scoped, tag = 'scoped memory for attention_forward.5']
    #allocation5 [shape = 'u8[262144]{0}', space=vmem, size = 0x40000, scoped, tag = 'input window, operand 1']
    #allocation6 [shape = 's32[2]{0}', space=sflag, size = 0x8, scoped, tag = 'scoped memory for attention_forward.5']
    #allocation7 [shape = 'u8[1024]{0}', space=vmem, size = 0x400, scoped, tag = 'input window, operand 2']
    %10 = vsyncpa [#allocation4], 0
    %11 = vsyncpa [#allocation6], 0
    %s12 = scalar_lea.sflag [#allocation6], 1
    %13 = vsyncpa %s12, 0
    loop: start=0, step=1, limit=4
    $region2: #{attention_forward.5} parent=1 // loop_pre_header
      _
    $region3: #{attention_forward.5} parent=1 // loop_header
      %s15 = sphi 0, %s19
      %p16 = scmp.ge.s32.totalorder %s15, 4
      %s22 = sphi 0, %s41
      %s23 = sphi 0, %s37
      %s24 = sphi 0, %s33
      %s25 = sphi 0, %s22
      %s26 = sphi 0, %s23
      %s27 = sphi 0, %s24
      %s28 = sphi 0, %s25
      %s29 = sphi 0, %s26
      %s30 = sphi 0, %s27
      %s46 = sphi 0, %s48
      %s49 = sphi 0, %s46
      %s50 = sphi 0, %s49
      %s66 = sphi 0, %s50
      %s74 = sphi 0, %s76
      %s77 = sphi 0, %s74
      %s78 = sphi 0, %s77
      %s94 = sphi 0, %s78
      %s100 = sphi 0, %s102
      %s103 = sphi 0, %s100
      %s104 = sphi 0, %s103
      %s120 = sphi 0, %s104
      %s126 = sphi 0, %s128
      %s129 = sphi 0, %s126
      %s130 = sphi 0, %s129
      %s146 = sphi 0, %s130
      %s152 = sphi 0, %s154
      %s155 = sphi 0, %s152
      %s156 = sphi 0, %s155
      %s172 = sphi 0, %s156
      %s180 = sphi 0, %s182
      %s183 = sphi 0, %s180
      %s184 = sphi 0, %s183
      %s200 = sphi 0, %s184
    $region4: #{attention_forward.5} parent=1 // loop_header_branch
      %18 = sbr.rel (%p16) target = $region8
    $region5: #{attention_forward.5} parent=1 // loop_body
      %s20 = ssub.s32 %s15, 1
      %s21 = ssub.s32 %s15, 2
      %s31 = sadd.s32 1, %s24
      %p32 = scmp.ge.s32.totalorder %s31, 1
      %s33 = scalar_select %p32, 0, %s31
      %s34 = sadd.s32 1, %s23
      %s35 = scalar_select %p32, %s34, %s23
      %p36 = scmp.ge.s32.totalorder %s35, 1
      %s37 = scalar_select %p36, 0, %s35
      %s38 = sadd.s32 1, %s22
      %s39 = scalar_select %p36, %s38, %s22
      %p40 = scmp.ge.s32.totalorder %s39, 2
      %s41 = scalar_select %p40, 0, %s39
      %s42 = ssub.s32 %s23, %s37
      %s43 = ssub.s32 %s24, %s33
      %s44 = sor.u32 %s42, %s43
      %p45 = scmp.eq.s32.totalorder %s44, 0
      %s47 = sadd.s32 %s46, 1
      %s48 = scalar_select %p45, %s46, %s47
      %p51 = pneg %p45
      %p52 = scmp.eq.s32.totalorder %s15, 1
      %p53 = por %p51, %p52
      %p54 = scmp.ne.s32.totalorder %s46, %s49
      %p55 = scmp.eq.s32.totalorder %s15, 0
      %p56 = por %p54, %p55
      %p57 = scmp.ne.s32.totalorder %s46, %s49
      %p58 = scmp.eq.s32.totalorder %s20, 1
      %p59 = por %p57, %p58
      %p60 = scmp.ne.s32.totalorder %s49, %s50
      %p61 = scmp.eq.s32.totalorder %s20, 0
      %p62 = por %p60, %p61
      %p63 = scmp.ne.s32.totalorder %s49, %s50
      %p64 = scmp.eq.s32.totalorder %s21, 1
      %p65 = por %p63, %p64
      %p67 = scmp.ne.s32.totalorder %s50, %s66
      %p68 = scmp.eq.s32.totalorder %s21, 0
      %p69 = por %p67, %p68
      %s70 = ssub.s32 %s22, %s41
      %s71 = ssub.s32 %s24, %s33
      %s72 = sor.u32 %s70, %s71
      %p73 = scmp.eq.s32.totalorder %s72, 0
      %s75 = sadd.s32 %s74, 1
      %s76 = scalar_select %p73, %s74, %s75
      %p79 = pneg %p73
      %p80 = scmp.eq.s32.totalorder %s15, 1
      %p81 = por %p79, %p80
      %p82 = scmp.ne.s32.totalorder %s74, %s77
      %p83 = scmp.eq.s32.totalorder %s15, 0
      %p84 = por %p82, %p83
      %p85 = scmp.ne.s32.totalorder %s74, %s77
      %p86 = scmp.eq.s32.totalorder %s20, 1
      %p87 = por %p85, %p86
      %p88 = scmp.ne.s32.totalorder %s77, %s78
      %p89 = scmp.eq.s32.totalorder %s20, 0
      %p90 = por %p88, %p89
      %p91 = scmp.ne.s32.totalorder %s77, %s78
      %p92 = scmp.eq.s32.totalorder %s21, 1
      %p93 = por %p91, %p92
      %p95 = scmp.ne.s32.totalorder %s78, %s94
      %p96 = scmp.eq.s32.totalorder %s21, 0
      %p97 = por %p95, %p96
      %s98 = ssub.s32 %s22, %s41
      %p99 = scmp.eq.s32.totalorder %s98, 0
      %s101 = sadd.s32 %s100, 1
      %s102 = scalar_select %p99, %s100, %s101
      %p105 = pneg %p99
      %p106 = scmp.eq.s32.totalorder %s15, 1
      %p107 = por %p105, %p106
      %p108 = scmp.ne.s32.totalorder %s100, %s103
      %p109 = scmp.eq.s32.totalorder %s15, 0
      %p110 = por %p108, %p109
      %p111 = scmp.ne.s32.totalorder %s100, %s103
      %p112 = scmp.eq.s32.totalorder %s20, 1
      %p113 = por %p111, %p112
      %p114 = scmp.ne.s32.totalorder %s103, %s104
      %p115 = scmp.eq.s32.totalorder %s20, 0
      %p116 = por %p114, %p115
      %p117 = scmp.ne.s32.totalorder %s103, %s104
      %p118 = scmp.eq.s32.totalorder %s21, 1
      %p119 = por %p117, %p118
      %p121 = scmp.ne.s32.totalorder %s104, %s120
      %p122 = scmp.eq.s32.totalorder %s21, 0
      %p123 = por %p121, %p122
      %s124 = ssub.s32 %s23, %s37
      %p125 = scmp.eq.s32.totalorder %s124, 0
      %s127 = sadd.s32 %s126, 1
      %s128 = scalar_select %p125, %s126, %s127
      %p131 = pneg %p125
      %p132 = scmp.eq.s32.totalorder %s15, 1
      %p133 = por %p131, %p132
      %p134 = scmp.ne.s32.totalorder %s126, %s129
      %p135 = scmp.eq.s32.totalorder %s15, 0
      %p136 = por %p134, %p135
      %p137 = scmp.ne.s32.totalorder %s126, %s129
      %p138 = scmp.eq.s32.totalorder %s20, 1
      %p139 = por %p137, %p138
      %p140 = scmp.ne.s32.totalorder %s129, %s130
      %p141 = scmp.eq.s32.totalorder %s20, 0
      %p142 = por %p140, %p141
      %p143 = scmp.ne.s32.totalorder %s129, %s130
      %p144 = scmp.eq.s32.totalorder %s21, 1
      %p145 = por %p143, %p144
      %p147 = scmp.ne.s32.totalorder %s130, %s146
      %p148 = scmp.eq.s32.totalorder %s21, 0
      %p149 = por %p147, %p148
      %s150 = ssub.s32 %s23, %s37
      %p151 = scmp.eq.s32.totalorder %s150, 0
      %s153 = sadd.s32 %s152, 1
      %s154 = scalar_select %p151, %s152, %s153
      %p157 = pneg %p151
      %p158 = scmp.eq.s32.totalorder %s15, 1
      %p159 = por %p157, %p158
      %p160 = scmp.ne.s32.totalorder %s152, %s155
      %p161 = scmp.eq.s32.totalorder %s15, 0
      %p162 = por %p160, %p161
      %p163 = scmp.ne.s32.totalorder %s152, %s155
      %p164 = scmp.eq.s32.totalorder %s20, 1
      %p165 = por %p163, %p164
      %p166 = scmp.ne.s32.totalorder %s155, %s156
      %p167 = scmp.eq.s32.totalorder %s20, 0
      %p168 = por %p166, %p167
      %p169 = scmp.ne.s32.totalorder %s155, %s156
      %p170 = scmp.eq.s32.totalorder %s21, 1
      %p171 = por %p169, %p170
      %p173 = scmp.ne.s32.totalorder %s156, %s172
      %p174 = scmp.eq.s32.totalorder %s21, 0
      %p175 = por %p173, %p174
      %s176 = ssub.s32 %s22, %s41
      %s177 = ssub.s32 %s23, %s37
      %s178 = sor.u32 %s176, %s177
      %p179 = scmp.eq.s32.totalorder %s178, 0
      %s181 = sadd.s32 %s180, 1
      %s182 = scalar_select %p179, %s180, %s181
      %p185 = pneg %p179
      %p186 = scmp.eq.s32.totalorder %s15, 1
      %p187 = por %p185, %p186
      %p188 = scmp.ne.s32.totalorder %s180, %s183
      %p189 = scmp.eq.s32.totalorder %s15, 0
      %p190 = por %p188, %p189
      %p191 = scmp.ne.s32.totalorder %s180, %s183
      %p192 = scmp.eq.s32.totalorder %s20, 1
      %p193 = por %p191, %p192
      %p194 = scmp.ne.s32.totalorder %s183, %s184
      %p195 = scmp.eq.s32.totalorder %s20, 0
      %p196 = por %p194, %p195
      %p197 = scmp.ne.s32.totalorder %s183, %s184
      %p198 = scmp.eq.s32.totalorder %s21, 1
      %p199 = por %p197, %p198
      %p201 = scmp.ne.s32.totalorder %s184, %s200
      %p202 = scmp.eq.s32.totalorder %s21, 0
      %p203 = por %p201, %p202
      %p204 = scmp.le.s32.totalorder 1, %s15
      %p205 = scmp.lt.s32.totalorder %s15, 3
      %p206 = pnand %p204, %p205
      %p207 = pneg %p206
      // Predicated region
      $region9: #{attention_forward.5} parent=5 // pred_check
        _
      $region10: #{attention_forward.5} parent=5 // pred_check_branch
        %209 = sbr.rel (%p206) target = $region12
      $region11: #{attention_forward.5} parent=5 // pred_region
        %s210 = ssub.s32 %s15, 1
        // Predicated region
        $region13: #{attention_forward.5} parent=11 // pred_check
          %p211 = pneg %p62
        $region14: #{attention_forward.5} parent=11 // pred_check_branch
          %213 = sbr.rel (%p211) target = $region16
        $region15: #{attention_forward.5} parent=11 // pred_region
          %s214 = smul.u32 2, %s26
          %s215 = smul.u32 2, %s27
          %s217 = ssub.s32 512, 512
          %218 = vsyncadd [#allocation4], %s217
          %s219 = smul.addr %s214, 2
          %s220 = sadd.s32 %s215, %s219
          %s221 = smul.addr %s220, 128
          %s222 = scalar_lea.hbm %s0, %s221
          %s223 = sshll.u32 [#allocation3], 4
          %s224 = int_to_ptr.vmem [resolvable:$true] %s223
          %229 = dma.hbm_to_vmem [thread:$0]  %s222, 512, %s224, [#allocation4], 256, 256, 16
        $region16: #{attention_forward.5} parent=11 // pred_fallthru
          _
        // Predicated region
        $region17: #{attention_forward.5} parent=11 // pred_check
          %p230 = pneg %p142
        $region18: #{attention_forward.5} parent=11 // pred_check_branch
          %232 = sbr.rel (%p230) target = $region20
        $region19: #{attention_forward.5} parent=11 // pred_region
          %s233 = smul.u32 2, %s26
          %p234 = scmp.lt.s32.totalorder %s233, 1
          %s235 = scalar_select %p234, %s233, 1
          %s236 = smul.addr %s235, 8
          %s237 = scalar_lea.vmem %s3, %s236
          %s238 = smul.u32 2, %s26
        $region20: #{attention_forward.5} parent=11 // pred_fallthru
          _
        // Predicated region
        $region21: #{attention_forward.5} parent=11 // pred_check
          %p239 = pneg %p168
        $region22: #{attention_forward.5} parent=11 // pred_check_branch
          %241 = sbr.rel (%p239) target = $region24
        $region23: #{attention_forward.5} parent=11 // pred_region
          %s242 = smul.u32 2, %s26
          %p243 = scmp.lt.s32.totalorder %s242, 1
          %s244 = scalar_select %p243, %s242, 1
          %s245 = smul.addr %s244, 8
          %s246 = scalar_lea.vmem %s4, %s245
          %s247 = smul.u32 2, %s26
        $region24: #{attention_forward.5} parent=11 // pred_fallthru
          _
      $region12: #{attention_forward.5} parent=5 // pred_fallthru
        _
      %p248 = scmp.lt.s32.totalorder %s15, 2
      // Predicated region
      $region25: #{attention_forward.5} parent=5 // pred_check
        %p249 = pneg %p248
      $region26: #{attention_forward.5} parent=5 // pred_check_branch
        %251 = sbr.rel (%p249) target = $region28
      $region27: #{attention_forward.5} parent=5 // pred_region
        // Predicated region
        $region29: #{attention_forward.5} parent=27 // pred_check
          %p252 = pneg %p84
        $region30: #{attention_forward.5} parent=27 // pred_check_branch
          %254 = sbr.rel (%p252) target = $region32
        $region31: #{attention_forward.5} parent=27 // pred_region
          %s255 = sand.u32 %s15, 1
          %s256 = scalar_lea.sflag [#allocation6], %s255
          %s257 = sand.u32 %s74, 1
          %s258 = smul.addr %s257, 256
          %s259 = scalar_lea.vmem [#allocation5], %s258
          %s260 = smul.u32 32, %s24
          %s262 = ssub.s32 4096, 4096
          %263 = vsyncadd %s256, %s262
          %s264 = smul.addr %s22, 32
          %s265 = sadd.s32 %s260, %s264
          %s266 = smul.addr %s265, 128
          %s267 = scalar_lea.hbm %s1, %s266
          %s268 = sshll.u32 %s259, 4
          %s269 = int_to_ptr.vmem [resolvable:$true] %s268
          %274 = dma.hbm_to_vmem [thread:$0]  %s267, 4096, %s269, %s256, 128, 128, 8
        $region32: #{attention_forward.5} parent=27 // pred_fallthru
          _
        // Predicated region
        $region33: #{attention_forward.5} parent=27 // pred_check
          %p275 = pneg %p110
        $region34: #{attention_forward.5} parent=27 // pred_check_branch
          %277 = sbr.rel (%p275) target = $region36
        $region35: #{attention_forward.5} parent=27 // pred_region
          %s278 = sand.u32 %s15, 1
          %s279 = scalar_lea.sflag [#allocation6], %s278
          %s280 = sand.u32 %s100, 1
          %s281 = scalar_lea.vmem [#allocation7], %s280
          %s283 = ssub.s32 16, 16
          %284 = vsyncadd %s279, %s283
          %s285 = smul.addr %s22, 16
          %s286 = scalar_lea.hbm %s2, %s285
          %s288 = sshll.u32 %s281, 4
          %s289 = int_to_ptr.vmem [resolvable:$true] %s288
          %291 = dma.hbm_to_vmem [thread:$0]  %s286, 16, %s289, %s279
        $region36: #{attention_forward.5} parent=27 // pred_fallthru
          _
      $region28: #{attention_forward.5} parent=5 // pred_fallthru
        _
      %p292 = scmp.le.s32.totalorder 1, %s15
      %p293 = scmp.lt.s32.totalorder %s15, 3
      %p294 = pnand %p292, %p293
      %p295 = pneg %p294
      // Predicated region
      $region37: #{attention_forward.5} parent=5 // pred_check
        _
      $region38: #{attention_forward.5} parent=5 // pred_check_branch
        %297 = sbr.rel (%p294) target = $region40
      $region39: #{attention_forward.5} parent=5 // pred_region
        %s298 = ssub.s32 %s15, 1
        // Predicated region
        $region41: #{attention_forward.5} parent=39 // pred_check
          %p299 = pneg %p62
        $region42: #{attention_forward.5} parent=39 // pred_check_branch
          %301 = sbr.rel (%p299) target = $region44
        $region43: #{attention_forward.5} parent=39 // pred_region
          %302 = dma.done [#allocation4], 512
        $region44: #{attention_forward.5} parent=39 // pred_fallthru
          _
        %s303 = sand.u32 %s20, 1
        %s304 = scalar_lea.sflag [#allocation6], %s303
        %s305 = sand.u32 %s77, 1
        %s306 = smul.addr %s305, 256
        %s307 = scalar_lea.vmem [#allocation5], %s306
        // Predicated region
        $region45: #{attention_forward.5} parent=39 // pred_check
          %p308 = pneg %p90
        $region46: #{attention_forward.5} parent=39 // pred_check_branch
          %310 = sbr.rel (%p308) target = $region48
        $region47: #{attention_forward.5} parent=39 // pred_region
          %311 = dma.done %s304, 4096
        $region48: #{attention_forward.5} parent=39 // pred_fallthru
          _
        %s312 = sand.u32 %s20, 1
        %s313 = scalar_lea.sflag [#allocation6], %s312
        %s314 = sand.u32 %s103, 1
        %s315 = scalar_lea.vmem [#allocation7], %s314
        // Predicated region
        $region49: #{attention_forward.5} parent=39 // pred_check
          %p316 = pneg %p116
        $region50: #{attention_forward.5} parent=39 // pred_check_branch
          %318 = sbr.rel (%p316) target = $region52
        $region51: #{attention_forward.5} parent=39 // pred_region
          %319 = dma.done %s313, 16
        $region52: #{attention_forward.5} parent=39 // pred_fallthru
          _
        %p320 = pneg %p62
        %p321 = pneg %p59
        %s322 = sand.u32 %s20, 1
        %s323 = scalar_lea.sflag [#allocation6], %s322
        %s324 = sand.u32 %s77, 1
        %s325 = smul.addr %s324, 256
        %s326 = scalar_lea.vmem [#allocation5], %s325
        %p327 = pneg %p90
        %p328 = pneg %p87
        %s329 = sand.u32 %s20, 1
        %s330 = scalar_lea.sflag [#allocation6], %s329
        %s331 = sand.u32 %s103, 1
        %s332 = scalar_lea.vmem [#allocation7], %s331
        %p333 = pneg %p116
        %p334 = pneg %p113
        %s335 = smul.u32 2, %s26
        %p336 = scmp.lt.s32.totalorder %s335, 1
        %s337 = scalar_select %p336, %s335, 1
        %s338 = smul.addr %s337, 8
        %s339 = scalar_lea.vmem %s3, %s338
        %p340 = pneg %p142
        %p341 = pneg %p139
        %s342 = smul.u32 2, %s26
        %p343 = scmp.lt.s32.totalorder %s342, 1
        %s344 = scalar_select %p343, %s342, 1
        %s345 = smul.addr %s344, 8
        %s346 = scalar_lea.vmem %s4, %s345
        %p347 = pneg %p168
        %p348 = pneg %p165
        %p349 = pneg %p196
        %p350 = pneg %p193
        %s351 = smul.u32 2, %s26
        %p352 = scmp.lt.s32.totalorder %s25, 1
        %s353 = scalar_select %p352, %s25, 1
        %p354 = scmp.lt.s32.totalorder %s351, 1
        %s355 = scalar_select %p354, %s351, 1
        %s356 = smul.addr %s353, 2
        %s357 = sadd.s32 %s355, %s356
        %s358 = smul.addr %s357, 8
        %s359 = scalar_lea.vmem %s5, %s358
        %s360 = smul.u32 2, %s26
        %s361 = smul.u32 2, %s27
        %s362 = smul.u32 32, %s27
        %s363 = smul.u32 2, %s26
        %p364 = scmp.lt.s32.totalorder %s363, 1
        %s365 = scalar_select %p364, %s363, 1
        %s366 = smul.addr %s365, 8
        %s367 = scalar_lea.vmem %s3, %s366
        %s368 = smul.u32 2, %s26
        %s369 = smul.u32 2, %s26
        %p370 = scmp.lt.s32.totalorder %s369, 1
        %s371 = scalar_select %p370, %s369, 1
        %s372 = smul.addr %s371, 8
        %s373 = scalar_lea.vmem %s4, %s372
        %s374 = smul.u32 2, %s26
        %s375 = smul.u32 2, %s26
        %p376 = scmp.lt.s32.totalorder %s25, 1
        %s377 = scalar_select %p376, %s25, 1
        %p378 = scmp.lt.s32.totalorder %s375, 1
        %s379 = scalar_select %p378, %s375, 1
        %s380 = smul.addr %s377, 2
        %s381 = sadd.s32 %s379, %s380
        %s382 = smul.addr %s381, 8
        %s383 = scalar_lea.vmem %s5, %s382
        %s384 = smul.u32 2, %s26
        %p385 = scmp.eq.s32.totalorder %s27, 0
        // Predicated region
        $region53: #{attention_forward.5} parent=39 // pred_check
          %p386 = pneg %p385
        $region54: #{attention_forward.5} parent=39 // pred_check_branch
          %388 = sbr.rel (%p386) target = $region56
        $region55: #{attention_forward.5} parent=39 // pred_region
          %389 = vst [vmem:[#allocation2] sm:$0xff] 0.0
          %390 = vst [vmem:[#allocation2 + $0x8] sm:$0xff] 0.0
        $region56: #{attention_forward.5} parent=39 // pred_fallthru
          _
        %v391 = vld [vmem:[#allocation2] sm:$0xff]
        %v392 = vld [vmem:[#allocation2 + $0x8] sm:$0xff]
        %v393 = vld [vmem:[#allocation3] sm:$0xff]
        %v394 = vld [vmem:[#allocation3 + $0x8] sm:$0xff]
        %v395 = vld [vmem:[#allocation3 + $0x10] sm:$0xff]
        %v396 = vld [vmem:[#allocation3 + $0x18] sm:$0xff]
        %v397 = vld [vmem:[%s307] sm:$0xff]
        %v398 = vld [vmem:[%s307 + $0x8] sm:$0xff]
        %v399 = vld [vmem:[%s307 + $0x10] sm:$0xff]
        %v400 = vld [vmem:[%s307 + $0x18] sm:$0xff]
        %v401 = vld [vmem:[%s307 + $0x20] sm:$0xff]
        %v402 = vld [vmem:[%s307 + $0x28] sm:$0xff]
        %v403 = vld [vmem:[%s307 + $0x30] sm:$0xff]
        %v404 = vld [vmem:[%s307 + $0x38] sm:$0xff]
        %v405 = vld [vmem:[%s307 + $0x40] sm:$0xff]
        %v406 = vld [vmem:[%s307 + $0x48] sm:$0xff]
        %v407 = vld [vmem:[%s307 + $0x50] sm:$0xff]
        %v408 = vld [vmem:[%s307 + $0x58] sm:$0xff]
        %v409 = vld [vmem:[%s307 + $0x60] sm:$0xff]
        %v410 = vld [vmem:[%s307 + $0x68] sm:$0xff]
        %v411 = vld [vmem:[%s307 + $0x70] sm:$0xff]
        %v412 = vld [vmem:[%s307 + $0x78] sm:$0xff]
        %v413 = vld [vmem:[%s307 + $0x80] sm:$0xff]
        %v414 = vld [vmem:[%s307 + $0x88] sm:$0xff]
        %v415 = vld [vmem:[%s307 + $0x90] sm:$0xff]
        %v416 = vld [vmem:[%s307 + $0x98] sm:$0xff]
        %v417 = vld [vmem:[%s307 + $0xa0] sm:$0xff]
        %v418 = vld [vmem:[%s307 + $0xa8] sm:$0xff]
        %v419 = vld [vmem:[%s307 + $0xb0] sm:$0xff]
        %v420 = vld [vmem:[%s307 + $0xb8] sm:$0xff]
        %v421 = vld [vmem:[%s307 + $0xc0] sm:$0xff]
        %v422 = vld [vmem:[%s307 + $0xc8] sm:$0xff]
        %v423 = vld [vmem:[%s307 + $0xd0] sm:$0xff]
        %v424 = vld [vmem:[%s307 + $0xd8] sm:$0xff]
        %v425 = vld [vmem:[%s307 + $0xe0] sm:$0xff]
        %v426 = vld [vmem:[%s307 + $0xe8] sm:$0xff]
        %v427 = vld [vmem:[%s307 + $0xf0] sm:$0xff]
        %v428 = vld [vmem:[%s307 + $0xf8] sm:$0xff]
        %429 = vmatprep.subr.mxu0 0.0
        %430 = vmatpush1.msra.mxu0 %v412
        %431 = vmatprep.subr.mxu0 0.0
        %432 = vmatpush1.msra.mxu0 %v411
        %433 = vmatprep.subr.mxu0 0.0
        %434 = vmatpush1.msra.mxu0 %v410
        %435 = vmatprep.subr.mxu0 0.0
        %436 = vmatpush1.msra.mxu0 %v409
        %437 = vmatprep.subr.mxu0 0.0
        %438 = vmatpush1.msra.mxu0 %v408
        %439 = vmatprep.subr.mxu0 0.0
        %440 = vmatpush1.msra.mxu0 %v407
        %441 = vmatprep.subr.mxu0 0.0
        %442 = vmatpush1.msra.mxu0 %v406
        %443 = vmatprep.subr.mxu0 0.0
        %444 = vmatpush1.msra.mxu0 %v405
        %445 = vmatprep.subr.mxu0 0.0
        %446 = vmatpush1.msra.mxu0 %v404
        %447 = vmatprep.subr.mxu0 0.0
        %448 = vmatpush1.msra.mxu0 %v403
        %449 = vmatprep.subr.mxu0 0.0
        %450 = vmatpush1.msra.mxu0 %v402
        %451 = vmatprep.subr.mxu0 0.0
        %452 = vmatpush1.msra.mxu0 %v401
        %453 = vmatprep.subr.mxu0 0.0
        %454 = vmatpush1.msra.mxu0 %v400
        %455 = vmatprep.subr.mxu0 0.0
        %456 = vmatpush1.msra.mxu0 %v399
        %457 = vmatprep.subr.mxu0 0.0
        %458 = vmatpush1.msra.mxu0 %v398
        %459 = vmatprep.subr.mxu0 0.0
        %460 = vmatpush1.msra.mxu0 %v397
        %461 = vmatprep.subr.mxu0 0.0
        %462 = vmatpush2.msra.mxu0 %v428
        %463 = vmatprep.subr.mxu0 0.0
        %464 = vmatpush2.msra.mxu0 %v427
        %465 = vmatprep.subr.mxu0 0.0
        %466 = vmatpush2.msra.mxu0 %v426
        %467 = vmatprep.subr.mxu0 0.0
        %468 = vmatpush2.msra.mxu0 %v425
        %469 = vmatprep.subr.mxu0 0.0
        %470 = vmatpush2.msra.mxu0 %v424
        %471 = vmatprep.subr.mxu0 0.0
        %472 = vmatpush2.msra.mxu0 %v423
        %473 = vmatprep.subr.mxu0 0.0
        %474 = vmatpush2.msra.mxu0 %v422
        %475 = vmatprep.subr.mxu0 0.0
        %476 = vmatpush2.msra.mxu0 %v421
        %477 = vmatprep.subr.mxu0 0.0
        %478 = vmatpush2.msra.mxu0 %v420
        %479 = vmatprep.subr.mxu0 0.0
        %480 = vmatpush2.msra.mxu0 %v419
        %481 = vmatprep.subr.mxu0 0.0
        %482 = vmatpush2.msra.mxu0 %v418
        %483 = vmatprep.subr.mxu0 0.0
        %484 = vmatpush2.msra.mxu0 %v417
        %485 = vmatprep.subr.mxu0 0.0
        %486 = vmatpush2.msra.mxu0 %v416
        %487 = vmatprep.subr.mxu0 0.0
        %488 = vmatpush2.msra.mxu0 %v415
        %489 = vmatprep.subr.mxu0 0.0
        %490 = vmatpush2.msra.mxu0 %v414
        %491 = vmatprep.subr.mxu0 0.0
        %492 = vmatpush2.msra.mxu0 %v413
        %493 = vmatprep.mubr.f32.mxu0 %v394
        %494 = vmatmul.mubr.f32.gmra.mxu0 %v393
        %v495 = vpop.f32.mrf.mxu0
        %v496 = vadd.f32 0.0, %v495
        %v497 = vpop.f32.mrf.mxu0
        %498 = vmatprep.mubr.f32.mxu0 %v396
        %499 = vmatmul.mubr.f32.gmra.mxu0 %v395
        %v500 = vpop.f32.mrf.mxu0
        %v501 = vadd.f32 0.0, %v500
        %v502 = vpop.f32.mrf.mxu0
        %503 = vdwg.mxu0
        %v504 = vadd.f32 %v391, %v496
        %v505 = vadd.f32 %v392, %v501
        %506 = vst [vmem:[#allocation2] sm:$0xff] %v504
        %507 = vst [vmem:[#allocation2 + $0x8] sm:$0xff] %v505
        // Predicated region
        $region57: #{attention_forward.5} parent=39 // pred_check
          %p508 = pneg %p385
        $region58: #{attention_forward.5} parent=39 // pred_check_branch
          %510 = sbr.rel (%p508) target = $region60
        $region59: #{attention_forward.5} parent=39 // pred_region
          %v511 = vld [vmem:[#allocation2] sm:$0xff]
          %v512 = vld [vmem:[#allocation2 + $0x8] sm:$0xff]
          %v513 = vld [vmem:[%s315] sm:$0x1]
          %v515 = vlaneseq
          %v516 = vshrl.u32 %v515, 7
          %v517 = vsub.s32 0, %v516
          %v518 = vrot.slane %v513, %v517
          %v520 = vadd.f32 %v511, %v518
          %v521 = vadd.f32 %v512, %v518
          %v522 = vld [vmem:[%s367] sm:$0xff]
          %v523 = vld [vmem:[%s367 + $0x8] sm:$0xff]
          %v524 = vld [vmem:[%s373] sm:$0xff]
          %v525 = vld [vmem:[%s373 + $0x8] sm:$0xff]
          %v526 = vmul.f32 %v520, %v522
          %v527 = vmul.f32 %v521, %v523
          %v528 = vsub.f32 0.0, %v520
          %v529 = vsub.f32 0.0, %v521
          %532 = vrot.lane.b32.xlu0 %v528, 96
          %v533 = vpop.permute.xlu0 %532
          %534 = vrot.lane.b32.xlu0 %v529, 96
          %v535 = vpop.permute.xlu0 %534
          %540 = vrot.lane.b32.xlu0 %v520, 32
          %v541 = vpop.permute.xlu0 %540
          %542 = vrot.lane.b32.xlu0 %v521, 32
          %v543 = vpop.permute.xlu0 %542
          %vm546 = vcmask 261120
          %v547 = vsel %vm546, %v533, %v541
          %v548 = vsel %vm546, %v535, %v543
          %v549 = vmul.f32 %v547, %v524
          %v550 = vmul.f32 %v548, %v525
          %v551 = vadd.f32 %v526, %v549
          %v552 = vadd.f32 %v527, %v550
          %vm553 = vcmask 523264
          %v554 = vsel %vm553, %v551, %v520
          %v555 = vsel %vm553, %v552, %v521
          %556 = vst [vmem:[%s383] sm:$0xff] %v554
          %557 = vst [vmem:[%s383 + $0x8] sm:$0xff] %v555
        $region60: #{attention_forward.5} parent=39 // pred_fallthru
          _
        %s558 = smul.u32 2, %s26
        %p559 = scmp.lt.s32.totalorder %s25, 1
        %s560 = scalar_select %p559, %s25, 1
        %p561 = scmp.lt.s32.totalorder %s558, 1
        %s562 = scalar_select %p561, %s558, 1
        %s563 = smul.addr %s560, 2
        %s564 = sadd.s32 %s562, %s563
        %s565 = smul.addr %s564, 8
        %s566 = scalar_lea.vmem %s5, %s565
        // Predicated region
        $region61: #{attention_forward.5} parent=39 // pred_check
          %p567 = pneg %p193
        $region62: #{attention_forward.5} parent=39 // pred_check_branch
          %569 = sbr.rel (%p567) target = $region64
        $region63: #{attention_forward.5} parent=39 // pred_region
          %s570 = smul.u32 2, %s26
        $region64: #{attention_forward.5} parent=39 // pred_fallthru
          _
      $region40: #{attention_forward.5} parent=5 // pred_fallthru
        _
      %p571 = scmp.le.s32.totalorder 2, %s15
      // Predicated region
      $region65: #{attention_forward.5} parent=5 // pred_check
        %p572 = pneg %p571
      $region66: #{attention_forward.5} parent=5 // pred_check_branch
        %574 = sbr.rel (%p572) target = $region68
      $region67: #{attention_forward.5} parent=5 // pred_region
        %s575 = ssub.s32 %s15, 2
        // Predicated region
        $region69: #{attention_forward.5} parent=67 // pred_check
          %p576 = pneg %p199
        $region70: #{attention_forward.5} parent=67 // pred_check_branch
          %578 = sbr.rel (%p576) target = $region72
        $region71: #{attention_forward.5} parent=67 // pred_region
          %s579 = smul.u32 2, %s29
          %p580 = scmp.lt.s32.totalorder %s28, 1
          %s581 = scalar_select %p580, %s28, 1
          %p582 = scmp.lt.s32.totalorder %s579, 1
          %s583 = scalar_select %p582, %s579, 1
          %s584 = smul.addr %s581, 2
          %s585 = sadd.s32 %s583, %s584
          %s586 = smul.addr %s585, 8
          %s587 = scalar_lea.vmem %s5, %s586
        $region72: #{attention_forward.5} parent=67 // pred_fallthru
          _
      $region68: #{attention_forward.5} parent=5 // pred_fallthru
        _
    $region6: #{attention_forward.5} parent=1 // loop_footer
      %s19 = sadd.s32 1, %s15
    $region7: #{attention_forward.5} parent=1 // loop_footer_branch
      %14 = sbr.rel target = $region3
    $region8: #{attention_forward.5} parent=1 // loop_exit
      _
    %588 = vsyncpa [#allocation4], 1
    %s589 = scalar_lea.sflag [#allocation4], 1
    %590 = vsyncpa %s589, 1
    %591 = vsyncpa [#allocation6], 1
    %s592 = scalar_lea.sflag [#allocation6], 1
    %593 = vsyncpa %s592, 1

// kernel: attention_forward.4
$region0: #{attention_forward.4}
  #allocation0 [shape = 'u32[]', space=smem, size = 0x4, offset = 0x4, fixed_abs, tag = 'smem constant byte address 0x4 - core index']
  #allocation1 [shape = 'u32[144,128]{1,0:T(1,128)}', space=vmem, size = 0x12000, scoped, tag = 'internal scratch']
  #allocation2 [shape = 'f32[16,256]{1,0:T(8,128)}', space=vmem, size = 0x4000, scoped, tag = 'scratch operand']
  %s0 = inlined_call_operand.vmem [shape: f32[16,256], index: 0, kind: input, shape index: {}]
  %s1 = inlined_call_operand.vmem [shape: f32[256,256], index: 1, kind: input, shape index: {}]
  %s2 = inlined_call_operand.vmem [shape: f32[1,256], index: 2, kind: input, shape index: {}]
  %s3 = inlined_call_operand.vmem [shape: f32[16,256], index: 3, kind: output, shape index: {}]
  %s4 = sld [smem:[#allocation0]]
  $region30: #{attention_forward.4} parent=0
    _
  %s6 = ssub.s32 1, %s4
  %s7 = scalar_select 0, %s6, %s4
  // Predicated region
  $region2: #{attention_forward.4} parent=0 // pred_check
    _
  $region3: #{attention_forward.4} parent=0 // pred_check_branch
    %9 = sbr.rel (0) target = $region5
  $region4: #{attention_forward.4} parent=0 // pred_region
    _
  $region5: #{attention_forward.4} parent=0 // pred_fallthru
    _
  // Predicated region
  $region6: #{attention_forward.4} parent=0 // pred_check
    _
  $region7: #{attention_forward.4} parent=0 // pred_check_branch
    %11 = sbr.rel (0) target = $region9
  $region8: #{attention_forward.4} parent=0 // pred_region
    _
  $region9: #{attention_forward.4} parent=0 // pred_fallthru
    _
  // Predicated region
  $region10: #{attention_forward.4} parent=0 // pred_check
    _
  $region11: #{attention_forward.4} parent=0 // pred_check_branch
    %13 = sbr.rel (0) target = $region13
  $region12: #{attention_forward.4} parent=0 // pred_region
    _
  $region13: #{attention_forward.4} parent=0 // pred_fallthru
    _
  %p14 = scmp.eq.s32.totalorder 0, 0
  // Predicated region
  $region14: #{attention_forward.4} parent=0 // pred_check
    %p15 = pneg %p14
  $region15: #{attention_forward.4} parent=0 // pred_check_branch
    %17 = sbr.rel (%p15) target = $region17
  $region16: #{attention_forward.4} parent=0 // pred_region
    %18 = vst [vmem:[#allocation2] sm:$0xff] 0.0
    %19 = vst [vmem:[#allocation2 + $0x8] sm:$0xff] 0.0
    %20 = vst [vmem:[#allocation2 + $0x10] sm:$0xff] 0.0
    %21 = vst [vmem:[#allocation2 + $0x18] sm:$0xff] 0.0
  $region17: #{attention_forward.4} parent=0 // pred_fallthru
    _
  %v22 = vld [vmem:[#allocation2] sm:$0xff]
  %v23 = vld [vmem:[#allocation2 + $0x8] sm:$0xff]
  %v24 = vld [vmem:[#allocation2 + $0x10] sm:$0xff]
  %v25 = vld [vmem:[#allocation2 + $0x18] sm:$0xff]
  %v26 = vld [vmem:[%s0] sm:$0xff]
  %v27 = vld [vmem:[%s0 + $0x8] sm:$0xff]
  %v28 = vld [vmem:[%s0 + $0x10] sm:$0xff]
  %v29 = vld [vmem:[%s0 + $0x18] sm:$0xff]
  %v30 = vld [vmem:[%s1] sm:$0xff]
  %v31 = vld [vmem:[%s1 + $0x8] sm:$0xff]
  %v32 = vld [vmem:[%s1 + $0x10] sm:$0xff]
  %v33 = vld [vmem:[%s1 + $0x18] sm:$0xff]
  %v34 = vld [vmem:[%s1 + $0x20] sm:$0xff]
  %v35 = vld [vmem:[%s1 + $0x28] sm:$0xff]
  %v36 = vld [vmem:[%s1 + $0x30] sm:$0xff]
  %v37 = vld [vmem:[%s1 + $0x38] sm:$0xff]
  %v38 = vld [vmem:[%s1 + $0x40] sm:$0xff]
  %v39 = vld [vmem:[%s1 + $0x48] sm:$0xff]
  %v40 = vld [vmem:[%s1 + $0x50] sm:$0xff]
  %v41 = vld [vmem:[%s1 + $0x58] sm:$0xff]
  %v42 = vld [vmem:[%s1 + $0x60] sm:$0xff]
  %v43 = vld [vmem:[%s1 + $0x68] sm:$0xff]
  %v44 = vld [vmem:[%s1 + $0x70] sm:$0xff]
  %v45 = vld [vmem:[%s1 + $0x78] sm:$0xff]
  %v46 = vld [vmem:[%s1 + $0x80] sm:$0xff]
  %v47 = vld [vmem:[%s1 + $0x88] sm:$0xff]
  %v48 = vld [vmem:[%s1 + $0x90] sm:$0xff]
  %v49 = vld [vmem:[%s1 + $0x98] sm:$0xff]
  %v50 = vld [vmem:[%s1 + $0xa0] sm:$0xff]
  %v51 = vld [vmem:[%s1 + $0xa8] sm:$0xff]
  %v52 = vld [vmem:[%s1 + $0xb0] sm:$0xff]
  %v53 = vld [vmem:[%s1 + $0xb8] sm:$0xff]
  %v54 = vld [vmem:[%s1 + $0xc0] sm:$0xff]
  %v55 = vld [vmem:[%s1 + $0xc8] sm:$0xff]
  %v56 = vld [vmem:[%s1 + $0xd0] sm:$0xff]
  %v57 = vld [vmem:[%s1 + $0xd8] sm:$0xff]
  %v58 = vld [vmem:[%s1 + $0xe0] sm:$0xff]
  %v59 = vld [vmem:[%s1 + $0xe8] sm:$0xff]
  %v60 = vld [vmem:[%s1 + $0xf0] sm:$0xff]
  %v61 = vld [vmem:[%s1 + $0xf8] sm:$0xff]
  %v62 = vld [vmem:[%s1 + $0x100] sm:$0xff]
  %v63 = vld [vmem:[%s1 + $0x108] sm:$0xff]
  %v64 = vld [vmem:[%s1 + $0x110] sm:$0xff]
  %v65 = vld [vmem:[%s1 + $0x118] sm:$0xff]
  %v66 = vld [vmem:[%s1 + $0x120] sm:$0xff]
  %v67 = vld [vmem:[%s1 + $0x128] sm:$0xff]
  %v68 = vld [vmem:[%s1 + $0x130] sm:$0xff]
  %v69 = vld [vmem:[%s1 + $0x138] sm:$0xff]
  %v70 = vld [vmem:[%s1 + $0x140] sm:$0xff]
  %v71 = vld [vmem:[%s1 + $0x148] sm:$0xff]
  %v72 = vld [vmem:[%s1 + $0x150] sm:$0xff]
  %v73 = vld [vmem:[%s1 + $0x158] sm:$0xff]
  %v74 = vld [vmem:[%s1 + $0x160] sm:$0xff]
  %v75 = vld [vmem:[%s1 + $0x168] sm:$0xff]
  %v76 = vld [vmem:[%s1 + $0x170] sm:$0xff]
  %v77 = vld [vmem:[%s1 + $0x178] sm:$0xff]
  %v78 = vld [vmem:[%s1 + $0x180] sm:$0xff]
  %v79 = vld [vmem:[%s1 + $0x188] sm:$0xff]
  %v80 = vld [vmem:[%s1 + $0x190] sm:$0xff]
  %v81 = vld [vmem:[%s1 + $0x198] sm:$0xff]
  %v82 = vld [vmem:[%s1 + $0x1a0] sm:$0xff]
  %v83 = vld [vmem:[%s1 + $0x1a8] sm:$0xff]
  %v84 = vld [vmem:[%s1 + $0x1b0] sm:$0xff]
  %v85 = vld [vmem:[%s1 + $0x1b8] sm:$0xff]
  %v86 = vld [vmem:[%s1 + $0x1c0] sm:$0xff]
  %v87 = vld [vmem:[%s1 + $0x1c8] sm:$0xff]
  %v88 = vld [vmem:[%s1 + $0x1d0] sm:$0xff]
  %v89 = vld [vmem:[%s1 + $0x1d8] sm:$0xff]
  %v90 = vld [vmem:[%s1 + $0x1e0] sm:$0xff]
  %v91 = vld [vmem:[%s1 + $0x1e8] sm:$0xff]
  %v92 = vld [vmem:[%s1 + $0x1f0] sm:$0xff]
  %v93 = vld [vmem:[%s1 + $0x1f8] sm:$0xff]
  %94 = vmatprep.subr.mxu0 %v61
  %95 = vmatpush1.msra.mxu0 %v60
  %96 = vmatprep.subr.mxu0 %v59
  %97 = vmatpush1.msra.mxu0 %v58
  %98 = vmatprep.subr.mxu0 %v57
  %99 = vmatpush1.msra.mxu0 %v56
  %100 = vmatprep.subr.mxu0 %v55
  %101 = vmatpush1.msra.mxu0 %v54
  %102 = vmatprep.subr.mxu0 %v53
  %103 = vmatpush1.msra.mxu0 %v52
  %104 = vmatprep.subr.mxu0 %v51
  %105 = vmatpush1.msra.mxu0 %v50
  %106 = vmatprep.subr.mxu0 %v49
  %107 = vmatpush1.msra.mxu0 %v48
  %108 = vmatprep.subr.mxu0 %v47
  %109 = vmatpush1.msra.mxu0 %v46
  %110 = vmatprep.subr.mxu0 %v45
  %111 = vmatpush1.msra.mxu0 %v44
  %112 = vmatprep.subr.mxu0 %v43
  %113 = vmatpush1.msra.mxu0 %v42
  %114 = vmatprep.subr.mxu0 %v41
  %115 = vmatpush1.msra.mxu0 %v40
  %116 = vmatprep.subr.mxu0 %v39
  %117 = vmatpush1.msra.mxu0 %v38
  %118 = vmatprep.subr.mxu0 %v37
  %119 = vmatpush1.msra.mxu0 %v36
  %120 = vmatprep.subr.mxu0 %v35
  %121 = vmatpush1.msra.mxu0 %v34
  %122 = vmatprep.subr.mxu0 %v33
  %123 = vmatpush1.msra.mxu0 %v32
  %124 = vmatprep.subr.mxu0 %v31
  %125 = vmatpush1.msra.mxu0 %v30
  %126 = vmatprep.subr.mxu0 %v93
  %127 = vmatpush2.msra.mxu0 %v92
  %128 = vmatprep.subr.mxu0 %v91
  %129 = vmatpush2.msra.mxu0 %v90
  %130 = vmatprep.subr.mxu0 %v89
  %131 = vmatpush2.msra.mxu0 %v88
  %132 = vmatprep.subr.mxu0 %v87
  %133 = vmatpush2.msra.mxu0 %v86
  %134 = vmatprep.subr.mxu0 %v85
  %135 = vmatpush2.msra.mxu0 %v84
  %136 = vmatprep.subr.mxu0 %v83
  %137 = vmatpush2.msra.mxu0 %v82
  %138 = vmatprep.subr.mxu0 %v81
  %139 = vmatpush2.msra.mxu0 %v80
  %140 = vmatprep.subr.mxu0 %v79
  %141 = vmatpush2.msra.mxu0 %v78
  %142 = vmatprep.subr.mxu0 %v77
  %143 = vmatpush2.msra.mxu0 %v76
  %144 = vmatprep.subr.mxu0 %v75
  %145 = vmatpush2.msra.mxu0 %v74
  %146 = vmatprep.subr.mxu0 %v73
  %147 = vmatpush2.msra.mxu0 %v72
  %148 = vmatprep.subr.mxu0 %v71
  %149 = vmatpush2.msra.mxu0 %v70
  %150 = vmatprep.subr.mxu0 %v69
  %151 = vmatpush2.msra.mxu0 %v68
  %152 = vmatprep.subr.mxu0 %v67
  %153 = vmatpush2.msra.mxu0 %v66
  %154 = vmatprep.subr.mxu0 %v65
  %155 = vmatpush2.msra.mxu0 %v64
  %156 = vmatprep.subr.mxu0 %v63
  %157 = vmatpush2.msra.mxu0 %v62
  %158 = vmatprep.mubr.f32.mxu0 %v27
  %159 = vmatmul.mubr.f32.gmra.mxu0 %v26
  %v160 = vpop.f32.mrf.mxu0
  %v161 = vadd.f32 0.0, %v160
  %v162 = vpop.f32.mrf.mxu0
  %v163 = vadd.f32 0.0, %v162
  %164 = vmatprep.mubr.f32.mxu0 %v29
  %165 = vmatmul.mubr.f32.gmra.mxu0 %v28
  %v166 = vpop.f32.mrf.mxu0
  %v167 = vadd.f32 0.0, %v166
  %v168 = vpop.f32.mrf.mxu0
  %v169 = vadd.f32 0.0, %v168
  %170 = vdwg.mxu0
  %v171 = vadd.f32 %v22, %v161
  %v172 = vadd.f32 %v23, %v163
  %v173 = vadd.f32 %v24, %v167
  %v174 = vadd.f32 %v25, %v169
  %175 = vst [vmem:[#allocation2] sm:$0xff] %v171
  %176 = vst [vmem:[#allocation2 + $0x8] sm:$0xff] %v172
  %177 = vst [vmem:[#allocation2 + $0x10] sm:$0xff] %v173
  %178 = vst [vmem:[#allocation2 + $0x18] sm:$0xff] %v174
  // Predicated region
  $region18: #{attention_forward.4} parent=0 // pred_check
    %p179 = pneg %p14
  $region19: #{attention_forward.4} parent=0 // pred_check_branch
    %181 = sbr.rel (%p179) target = $region21
  $region20: #{attention_forward.4} parent=0 // pred_region
    %v182 = vld [vmem:[#allocation2] sm:$0xff]
    %v183 = vld [vmem:[#allocation2 + $0x8] sm:$0xff]
    %v184 = vld [vmem:[#allocation2 + $0x10] sm:$0xff]
    %v185 = vld [vmem:[#allocation2 + $0x18] sm:$0xff]
    %v186 = vld [vmem:[%s2] sm:$0x3]
    %v188 = vlaneseq
    %v189 = vshrl.u32 %v188, 7
    %v190 = vsub.s32 0, %v189
    %v191 = vrot.slane %v186, %v190
    %v192 = vlaneseq
    %v193 = vshrl.u32 %v192, 7
    %v194 = vsub.s32 1, %v193
    %v195 = vrot.slane %v186, %v194
    %v198 = vadd.f32 %v182, %v191
    %v199 = vadd.f32 %v183, %v195
    %v200 = vadd.f32 %v184, %v191
    %v201 = vadd.f32 %v185, %v195
    %202 = vst [vmem:[%s3] sm:$0xff] %v198
    %203 = vst [vmem:[%s3 + $0x8] sm:$0xff] %v199
    %204 = vst [vmem:[%s3 + $0x10] sm:$0xff] %v200
    %205 = vst [vmem:[%s3 + $0x18] sm:$0xff] %v201
  $region21: #{attention_forward.4} parent=0 // pred_fallthru
    _
  // Predicated region
  $region22: #{attention_forward.4} parent=0 // pred_check
    _
  $region23: #{attention_forward.4} parent=0 // pred_check_branch
    %207 = sbr.rel (0) target = $region25
  $region24: #{attention_forward.4} parent=0 // pred_region
    _
  $region25: #{attention_forward.4} parent=0 // pred_fallthru
    _
  // Predicated region
  $region26: #{attention_forward.4} parent=0 // pred_check
    _
  $region27: #{attention_forward.4} parent=0 // pred_check_branch
    %209 = sbr.rel (0) target = $region29
  $region28: #{attention_forward.4} parent=0 // pred_region
    _
  $region29: #{attention_forward.4} parent=0 // pred_fallthru
    _

// kernel: attention_forward.6
$region0: #{attention_forward.6}
  #allocation0 [shape = 'u32[]', space=smem, size = 0x4, offset = 0x4, fixed_abs, tag = 'smem constant byte address 0x4 - core index']
  #allocation1 [shape = 'u32[144,128]{1,0:T(1,128)}', space=vmem, size = 0x12000, scoped, tag = 'internal scratch']
  #allocation2 [shape = 'f32[16,64]{1,0:T(8,128)}', space=vmem, size = 0x2000, scoped, tag = 'scratch operand']
  #allocation3 [shape = 'f32[16,1]{1,0:T(8,128)}', space=vmem, size = 0x2000, scoped, tag = 'scratch operand']
  #allocation4 [shape = 'f32[16,1]{1,0:T(8,128)}', space=vmem, size = 0x2000, scoped, tag = 'scratch operand']
  #allocation5 [shape = 'f32[16,64]{1,0:T(8,128)}', space=vmem, size = 0x2000, scoped, tag = 'scratch operand']
  %s0 = inlined_call_operand.vmem [shape: f32[2,8,256], index: 0, kind: input, shape index: {}]
  %s1 = inlined_call_operand.vmem [shape: f32[2,2,8,128], index: 1, kind: input, shape index: {}]
  %s2 = inlined_call_operand.vmem [shape: f32[2,8,64], index: 2, kind: input, shape index: {}]
  %s3 = inlined_call_operand.vmem [shape: f32[2,8,64], index: 3, kind: input, shape index: {}]
  %s4 = inlined_call_operand.vmem [shape: f32[2,8,256], index: 4, kind: output, shape index: {}]
  %s5 = sld [smem:[#allocation0]]
  $region57: #{attention_forward.6} parent=0
    _
  %s7 = ssub.s32 1, %s5
  %s8 = scalar_select 0, %s7, %s5
  loop: start=0, step=1, limit=6
  $region2: #{attention_forward.6} parent=0 // loop_pre_header
    _
  $region3: #{attention_forward.6} parent=0 // loop_header
    %s10 = sphi 0, %s14
    %p11 = scmp.ge.s32.totalorder %s10, 6
    %s17 = sphi 0, %s43
    %s18 = sphi 0, %s39
    %s19 = sphi 0, %s35
    %s20 = sphi 0, %s31
    %s21 = sphi 0, %s17
    %s22 = sphi 0, %s18
    %s23 = sphi 0, %s19
    %s24 = sphi 0, %s20
    %s25 = sphi 0, %s21
    %s26 = sphi 0, %s22
    %s27 = sphi 0, %s23
    %s28 = sphi 0, %s24
    %s50 = sphi 0, %s52
    %s53 = sphi 0, %s50
    %s54 = sphi 0, %s53
    %s70 = sphi 0, %s54
    %s80 = sphi 0, %s82
    %s83 = sphi 0, %s80
    %s84 = sphi 0, %s83
    %s100 = sphi 0, %s84
    %s108 = sphi 0, %s110
    %s111 = sphi 0, %s108
    %s112 = sphi 0, %s111
    %s128 = sphi 0, %s112
    %s136 = sphi 0, %s138
    %s139 = sphi 0, %s136
    %s140 = sphi 0, %s139
    %s156 = sphi 0, %s140
    %s166 = sphi 0, %s168
    %s169 = sphi 0, %s166
    %s170 = sphi 0, %s169
    %s186 = sphi 0, %s170
  $region4: #{attention_forward.6} parent=0 // loop_header_branch
    %13 = sbr.rel (%p11) target = $region8
  $region5: #{attention_forward.6} parent=0 // loop_body
    %s15 = ssub.s32 %s10, 1
    %s16 = ssub.s32 %s10, 2
    %s29 = sadd.s32 1, %s20
    %p30 = scmp.ge.s32.totalorder %s29, 1
    %s31 = scalar_select %p30, 0, %s29
    %s32 = sadd.s32 1, %s19
    %s33 = scalar_select %p30, %s32, %s19
    %p34 = scmp.ge.s32.totalorder %s33, 1
    %s35 = scalar_select %p34, 0, %s33
    %s36 = sadd.s32 1, %s18
    %s37 = scalar_select %p34, %s36, %s18
    %p38 = scmp.ge.s32.totalorder %s37, 2
    %s39 = scalar_select %p38, 0, %s37
    %s40 = sadd.s32 1, %s17
    %s41 = scalar_select %p38, %s40, %s17
    %p42 = scmp.ge.s32.totalorder %s41, 2
    %s43 = scalar_select %p42, 0, %s41
    %s44 = ssub.s32 %s17, %s43
    %s45 = ssub.s32 %s19, %s35
    %s46 = sor.u32 %s44, %s45
    %s47 = ssub.s32 %s18, %s39
    %s48 = sor.u32 %s46, %s47
    %p49 = scmp.eq.s32.totalorder %s48, 0
    %s51 = sadd.s32 %s50, 1
    %s52 = scalar_select %p49, %s50, %s51
    %p55 = pneg %p49
    %p56 = scmp.eq.s32.totalorder %s10, 3
    %p57 = por %p55, %p56
    %p58 = scmp.ne.s32.totalorder %s50, %s53
    %p59 = scmp.eq.s32.totalorder %s10, 0
    %p60 = por %p58, %p59
    %p61 = scmp.ne.s32.totalorder %s50, %s53
    %p62 = scmp.eq.s32.totalorder %s15, 3
    %p63 = por %p61, %p62
    %p64 = scmp.ne.s32.totalorder %s53, %s54
    %p65 = scmp.eq.s32.totalorder %s15, 0
    %p66 = por %p64, %p65
    %p67 = scmp.ne.s32.totalorder %s53, %s54
    %p68 = scmp.eq.s32.totalorder %s16, 3
    %p69 = por %p67, %p68
    %p71 = scmp.ne.s32.totalorder %s54, %s70
    %p72 = scmp.eq.s32.totalorder %s16, 0
    %p73 = por %p71, %p72
    %s74 = ssub.s32 %s18, %s39
    %s75 = ssub.s32 %s17, %s43
    %s76 = sor.u32 %s74, %s75
    %s77 = ssub.s32 %s20, %s31
    %s78 = sor.u32 %s76, %s77
    %p79 = scmp.eq.s32.totalorder %s78, 0
    %s81 = sadd.s32 %s80, 1
    %s82 = scalar_select %p79, %s80, %s81
    %p85 = pneg %p79
    %p86 = scmp.eq.s32.totalorder %s10, 3
    %p87 = por %p85, %p86
    %p88 = scmp.ne.s32.totalorder %s80, %s83
    %p89 = scmp.eq.s32.totalorder %s10, 0
    %p90 = por %p88, %p89
    %p91 = scmp.ne.s32.totalorder %s80, %s83
    %p92 = scmp.eq.s32.totalorder %s15, 3
    %p93 = por %p91, %p92
    %p94 = scmp.ne.s32.totalorder %s83, %s84
    %p95 = scmp.eq.s32.totalorder %s15, 0
    %p96 = por %p94, %p95
    %p97 = scmp.ne.s32.totalorder %s83, %s84
    %p98 = scmp.eq.s32.totalorder %s16, 3
    %p99 = por %p97, %p98
    %p101 = scmp.ne.s32.totalorder %s84, %s100
    %p102 = scmp.eq.s32.totalorder %s16, 0
    %p103 = por %p101, %p102
    %s104 = ssub.s32 %s17, %s43
    %s105 = ssub.s32 %s19, %s35
    %s106 = sor.u32 %s104, %s105
    %p107 = scmp.eq.s32.totalorder %s106, 0
    %s109 = sadd.s32 %s108, 1
    %s110 = scalar_select %p107, %s108, %s109
    %p113 = pneg %p107
    %p114 = scmp.eq.s32.totalorder %s10, 3
    %p115 = por %p113, %p114
    %p116 = scmp.ne.s32.totalorder %s108, %s111
    %p117 = scmp.eq.s32.totalorder %s10, 0
    %p118 = por %p116, %p117
    %p119 = scmp.ne.s32.totalorder %s108, %s111
    %p120 = scmp.eq.s32.totalorder %s15, 3
    %p121 = por %p119, %p120
    %p122 = scmp.ne.s32.totalorder %s111, %s112
    %p123 = scmp.eq.s32.totalorder %s15, 0
    %p124 = por %p122, %p123
    %p125 = scmp.ne.s32.totalorder %s111, %s112
    %p126 = scmp.eq.s32.totalorder %s16, 3
    %p127 = por %p125, %p126
    %p129 = scmp.ne.s32.totalorder %s112, %s128
    %p130 = scmp.eq.s32.totalorder %s16, 0
    %p131 = por %p129, %p130
    %s132 = ssub.s32 %s17, %s43
    %s133 = ssub.s32 %s19, %s35
    %s134 = sor.u32 %s132, %s133
    %p135 = scmp.eq.s32.totalorder %s134, 0
    %s137 = sadd.s32 %s136, 1
    %s138 = scalar_select %p135, %s136, %s137
    %p141 = pneg %p135
    %p142 = scmp.eq.s32.totalorder %s10, 3
    %p143 = por %p141, %p142
    %p144 = scmp.ne.s32.totalorder %s136, %s139
    %p145 = scmp.eq.s32.totalorder %s10, 0
    %p146 = por %p144, %p145
    %p147 = scmp.ne.s32.totalorder %s136, %s139
    %p148 = scmp.eq.s32.totalorder %s15, 3
    %p149 = por %p147, %p148
    %p150 = scmp.ne.s32.totalorder %s139, %s140
    %p151 = scmp.eq.s32.totalorder %s15, 0
    %p152 = por %p150, %p151
    %p153 = scmp.ne.s32.totalorder %s139, %s140
    %p154 = scmp.eq.s32.totalorder %s16, 3
    %p155 = por %p153, %p154
    %p157 = scmp.ne.s32.totalorder %s140, %s156
    %p158 = scmp.eq.s32.totalorder %s16, 0
    %p159 = por %p157, %p158
    %s160 = ssub.s32 %s17, %s43
    %s161 = ssub.s32 %s19, %s35
    %s162 = sor.u32 %s160, %s161
    %s163 = ssub.s32 %s18, %s39
    %s164 = sor.u32 %s162, %s163
    %p165 = scmp.eq.s32.totalorder %s164, 0
    %s167 = sadd.s32 %s166, 1
    %s168 = scalar_select %p165, %s166, %s167
    %p171 = pneg %p165
    %p172 = scmp.eq.s32.totalorder %s10, 3
    %p173 = por %p171, %p172
    %p174 = scmp.ne.s32.totalorder %s166, %s169
    %p175 = scmp.eq.s32.totalorder %s10, 0
    %p176 = por %p174, %p175
    %p177 = scmp.ne.s32.totalorder %s166, %s169
    %p178 = scmp.eq.s32.totalorder %s15, 3
    %p179 = por %p177, %p178
    %p180 = scmp.ne.s32.totalorder %s169, %s170
    %p181 = scmp.eq.s32.totalorder %s15, 0
    %p182 = por %p180, %p181
    %p183 = scmp.ne.s32.totalorder %s169, %s170
    %p184 = scmp.eq.s32.totalorder %s16, 3
    %p185 = por %p183, %p184
    %p187 = scmp.ne.s32.totalorder %s170, %s186
    %p188 = scmp.eq.s32.totalorder %s16, 0
    %p189 = por %p187, %p188
    %p190 = scmp.le.s32.totalorder 1, %s10
    %p191 = scmp.lt.s32.totalorder %s10, 5
    %p192 = pnand %p190, %p191
    %p193 = pneg %p192
    // Predicated region
    $region9: #{attention_forward.6} parent=5 // pred_check
      _
    $region10: #{attention_forward.6} parent=5 // pred_check_branch
      %195 = sbr.rel (%p192) target = $region12
    $region11: #{attention_forward.6} parent=5 // pred_region
      %s196 = ssub.s32 %s10, 1
    $region12: #{attention_forward.6} parent=5 // pred_fallthru
      _
    %p197 = scmp.lt.s32.totalorder %s10, 4
    // Predicated region
    $region13: #{attention_forward.6} parent=5 // pred_check
      %p198 = pneg %p197
    $region14: #{attention_forward.6} parent=5 // pred_check_branch
      %200 = sbr.rel (%p198) target = $region16
    $region15: #{attention_forward.6} parent=5 // pred_region
      // Predicated region
      $region17: #{attention_forward.6} parent=15 // pred_check
        %p201 = pneg %p60
      $region18: #{attention_forward.6} parent=15 // pred_check_branch
        %203 = sbr.rel (%p201) target = $region20
      $region19: #{attention_forward.6} parent=15 // pred_region
        %p204 = scmp.lt.s32.totalorder %s17, 1
        %s205 = scalar_select %p204, %s17, 1
        %p206 = scmp.lt.s32.totalorder %s19, 0
        %s207 = scalar_select %p206, %s19, 0
        %p208 = scmp.lt.s32.totalorder %s18, 1
        %s209 = scalar_select %p208, %s18, 1
        %s210 = smul.addr %s207, 2
        %s211 = sadd.s32 %s209, %s210
        %s212 = smul.addr %s205, 2
        %s213 = sadd.s32 %s211, %s212
        %s214 = smul.addr %s213, 8
        %s215 = scalar_lea.vmem %s0, %s214
      $region20: #{attention_forward.6} parent=15 // pred_fallthru
        _
      // Predicated region
      $region21: #{attention_forward.6} parent=15 // pred_check
        %p216 = pneg %p90
      $region22: #{attention_forward.6} parent=15 // pred_check_branch
        %218 = sbr.rel (%p216) target = $region24
      $region23: #{attention_forward.6} parent=15 // pred_region
        %p219 = scmp.lt.s32.totalorder %s18, 1
        %s220 = scalar_select %p219, %s18, 1
        %p221 = scmp.lt.s32.totalorder %s17, 1
        %s222 = scalar_select %p221, %s17, 1
        %p223 = scmp.lt.s32.totalorder %s20, 0
        %s224 = scalar_select %p223, %s20, 0
        %s225 = sadd.s32 %s224, %s222
        %s226 = smul.addr %s220, 2
        %s227 = sadd.s32 %s225, %s226
        %s228 = smul.addr %s227, 8
        %s229 = scalar_lea.vmem %s1, %s228
      $region24: #{attention_forward.6} parent=15 // pred_fallthru
        _
      // Predicated region
      $region25: #{attention_forward.6} parent=15 // pred_check
        %p230 = pneg %p118
      $region26: #{attention_forward.6} parent=15 // pred_check_branch
        %232 = sbr.rel (%p230) target = $region28
      $region27: #{attention_forward.6} parent=15 // pred_region
        %p233 = scmp.lt.s32.totalorder %s17, 1
        %s234 = scalar_select %p233, %s17, 1
        %p235 = scmp.lt.s32.totalorder %s19, 0
        %s236 = scalar_select %p235, %s19, 0
        %s237 = sadd.s32 %s236, %s234
        %s238 = smul.addr %s237, 8
        %s239 = scalar_lea.vmem %s2, %s238
      $region28: #{attention_forward.6} parent=15 // pred_fallthru
        _
      // Predicated region
      $region29: #{attention_forward.6} parent=15 // pred_check
        %p240 = pneg %p146
      $region30: #{attention_forward.6} parent=15 // pred_check_branch
        %242 = sbr.rel (%p240) target = $region32
      $region31: #{attention_forward.6} parent=15 // pred_region
        %p243 = scmp.lt.s32.totalorder %s17, 1
        %s244 = scalar_select %p243, %s17, 1
        %p245 = scmp.lt.s32.totalorder %s19, 0
        %s246 = scalar_select %p245, %s19, 0
        %s247 = sadd.s32 %s246, %s244
        %s248 = smul.addr %s247, 8
        %s249 = scalar_lea.vmem %s3, %s248
      $region32: #{attention_forward.6} parent=15 // pred_fallthru
        _
    $region16: #{attention_forward.6} parent=5 // pred_fallthru
      _
    %p250 = scmp.le.s32.totalorder 1, %s10
    %p251 = scmp.lt.s32.totalorder %s10, 5
    %p252 = pnand %p250, %p251
    %p253 = pneg %p252
    // Predicated region
    $region33: #{attention_forward.6} parent=5 // pred_check
      _
    $region34: #{attention_forward.6} parent=5 // pred_check_branch
      %255 = sbr.rel (%p252) target = $region36
    $region35: #{attention_forward.6} parent=5 // pred_region
      %s256 = ssub.s32 %s10, 1
      %p257 = scmp.lt.s32.totalorder %s21, 1
      %s258 = scalar_select %p257, %s21, 1
      %p259 = scmp.lt.s32.totalorder %s23, 0
      %s260 = scalar_select %p259, %s23, 0
      %p261 = scmp.lt.s32.totalorder %s22, 1
      %s262 = scalar_select %p261, %s22, 1
      %s263 = smul.addr %s260, 2
      %s264 = sadd.s32 %s262, %s263
      %s265 = smul.addr %s258, 2
      %s266 = sadd.s32 %s264, %s265
      %s267 = smul.addr %s266, 8
      %s268 = scalar_lea.vmem %s0, %s267
      %p269 = pneg %p66
      %p270 = pneg %p63
      %p271 = scmp.lt.s32.totalorder %s22, 1
      %s272 = scalar_select %p271, %s22, 1
      %p273 = scmp.lt.s32.totalorder %s21, 1
      %s274 = scalar_select %p273, %s21, 1
      %p275 = scmp.lt.s32.totalorder %s24, 0
      %s276 = scalar_select %p275, %s24, 0
      %s277 = sadd.s32 %s276, %s274
      %s278 = smul.addr %s272, 2
      %s279 = sadd.s32 %s277, %s278
      %s280 = smul.addr %s279, 8
      %s281 = scalar_lea.vmem %s1, %s280
      %p282 = pneg %p96
      %p283 = pneg %p93
      %p284 = scmp.lt.s32.totalorder %s21, 1
      %s285 = scalar_select %p284, %s21, 1
      %p286 = scmp.lt.s32.totalorder %s23, 0
      %s287 = scalar_select %p286, %s23, 0
      %s288 = sadd.s32 %s287, %s285
      %s289 = smul.addr %s288, 8
      %s290 = scalar_lea.vmem %s2, %s289
      %p291 = pneg %p124
      %p292 = pneg %p121
      %p293 = scmp.lt.s32.totalorder %s21, 1
      %s294 = scalar_select %p293, %s21, 1
      %p295 = scmp.lt.s32.totalorder %s23, 0
      %s296 = scalar_select %p295, %s23, 0
      %s297 = sadd.s32 %s296, %s294
      %s298 = smul.addr %s297, 8
      %s299 = scalar_lea.vmem %s3, %s298
      %p300 = pneg %p152
      %p301 = pneg %p149
      %p302 = pneg %p182
      %p303 = pneg %p179
      %p304 = scmp.lt.s32.totalorder %s21, 1
      %s305 = scalar_select %p304, %s21, 1
      %p306 = scmp.lt.s32.totalorder %s23, 0
      %s307 = scalar_select %p306, %s23, 0
      %p308 = scmp.lt.s32.totalorder %s22, 1
      %s309 = scalar_select %p308, %s22, 1
      %s310 = smul.addr %s307, 2
      %s311 = sadd.s32 %s309, %s310
      %s312 = smul.addr %s305, 2
      %s313 = sadd.s32 %s311, %s312
      %s314 = smul.addr %s313, 8
      %s315 = scalar_lea.vmem %s4, %s314
      %p316 = scmp.lt.s32.totalorder %s21, 1
      %s317 = scalar_select %p316, %s21, 1
      %p318 = scmp.lt.s32.totalorder %s23, 0
      %s319 = scalar_select %p318, %s23, 0
      %p320 = scmp.lt.s32.totalorder %s22, 1
      %s321 = scalar_select %p320, %s22, 1
      %s322 = smul.addr %s319, 2
      %s323 = sadd.s32 %s321, %s322
      %s324 = smul.addr %s317, 2
      %s325 = sadd.s32 %s323, %s324
      %s326 = smul.addr %s325, 8
      %s327 = scalar_lea.vmem %s0, %s326
      %p328 = scmp.lt.s32.totalorder %s22, 1
      %s329 = scalar_select %p328, %s22, 1
      %p330 = scmp.lt.s32.totalorder %s21, 1
      %s331 = scalar_select %p330, %s21, 1
      %p332 = scmp.lt.s32.totalorder %s24, 0
      %s333 = scalar_select %p332, %s24, 0
      %s334 = sadd.s32 %s333, %s331
      %s335 = smul.addr %s329, 2
      %s336 = sadd.s32 %s334, %s335
      %s337 = smul.addr %s336, 8
      %s338 = scalar_lea.vmem %s1, %s337
      %p339 = scmp.lt.s32.totalorder %s21, 1
      %s340 = scalar_select %p339, %s21, 1
      %p341 = scmp.lt.s32.totalorder %s23, 0
      %s342 = scalar_select %p341, %s23, 0
      %s343 = sadd.s32 %s342, %s340
      %s344 = smul.addr %s343, 8
      %s345 = scalar_lea.vmem %s2, %s344
      %p346 = scmp.lt.s32.totalorder %s21, 1
      %s347 = scalar_select %p346, %s21, 1
      %p348 = scmp.lt.s32.totalorder %s23, 0
      %s349 = scalar_select %p348, %s23, 0
      %s350 = sadd.s32 %s349, %s347
      %s351 = smul.addr %s350, 8
      %s352 = scalar_lea.vmem %s3, %s351
      %p353 = scmp.lt.s32.totalorder %s21, 1
      %s354 = scalar_select %p353, %s21, 1
      %p355 = scmp.lt.s32.totalorder %s23, 0
      %s356 = scalar_select %p355, %s23, 0
      %p357 = scmp.lt.s32.totalorder %s22, 1
      %s358 = scalar_select %p357, %s22, 1
      %s359 = smul.addr %s356, 2
      %s360 = sadd.s32 %s358, %s359
      %s361 = smul.addr %s354, 2
      %s362 = sadd.s32 %s360, %s361
      %s363 = smul.addr %s362, 8
      %s364 = scalar_lea.vmem %s4, %s363
      %p365 = scmp.eq.s32.totalorder %s24, 0
      // Predicated region
      $region37: #{attention_forward.6} parent=35 // pred_check
        %p366 = pneg %p365
      $region38: #{attention_forward.6} parent=35 // pred_check_branch
        %368 = sbr.rel (%p366) target = $region40
      $region39: #{attention_forward.6} parent=35 // pred_region
        %vm369 = vcmask 7168
        %370 = vst.msk [vmem:[#allocation3] sm:$0xff] %vm369, -inf
        %371 = vst.msk [vmem:[#allocation3 + $0x8] sm:$0xff] %vm369, -inf
        %372 = vst.msk [vmem:[#allocation4] sm:$0xff] %vm369, 0.0
        %373 = vst.msk [vmem:[#allocation4 + $0x8] sm:$0xff] %vm369, 0.0
        %vm374 = vcmask 523264
        %375 = vst.msk [vmem:[#allocation5] sm:$0xff] %vm374, 0.0
        %376 = vst.msk [vmem:[#allocation5 + $0x8] sm:$0xff] %vm374, 0.0
        %v377 = vld [vmem:[%s345] sm:$0xff]
        %v378 = vld [vmem:[%s352] sm:$0xff]
        %v379 = vld [vmem:[%s327] sm:$0xff]
        %v380 = vmul.f32 %v379, %v377
        %v381 = vsub.f32 0.0, %v379
        %383 = vrot.lane.b32.xlu0 %v381, 96
        %v384 = vpop.permute.xlu0 %383
        %387 = vrot.lane.b32.xlu0 %v379, 32
        %v388 = vpop.permute.xlu0 %387
        %vm390 = vcmask 261120
        %v391 = vsel %vm390, %v384, %v388
        %v392 = vmul.f32 %v391, %v378
        %v393 = vadd.f32 %v380, %v392
        %v394 = vmul.f32 %v393, 0.125
        %395 = vst.msk [vmem:[#allocation2] sm:$0xff] %vm374, %v394
        %v396 = vld [vmem:[%s327] sm:$0xff]
        %398 = vrot.lane.b32.xlu0 %v377, 64
        %v399 = vpop.permute.xlu0 %398
        %v401 = vmul.f32 %v396, %v399
        %v402 = vsub.f32 0.0, %v396
        %404 = vrot.lane.b32.xlu0 %v402, 32
        %v405 = vpop.permute.xlu0 %404
        %408 = vrot.lane.b32.xlu0 %v396, 96
        %v409 = vpop.permute.xlu0 %408
        %v411 = vsel %vm390, %v405, %v409
        %v412 = vmul.f32 %v411, %v378
        %414 = vrot.lane.b32.xlu0 %v412, 64
        %v415 = vpop.permute.xlu0 %414
        %v417 = vadd.f32 %v401, %v415
        %v418 = vmul.f32 %v417, 0.125
        %420 = vrot.lane.b32.xlu0 %v418, 64
        %v421 = vpop.permute.xlu0 %420
        %423 = vst.msk [vmem:[#allocation2 + $0x8] sm:$0xff] %vm374, %v421
      $region40: #{attention_forward.6} parent=35 // pred_fallthru
        _
      %v424 = vld [vmem:[%s338] sm:$0xff]
      %v425 = vld [vmem:[#allocation2] sm:$0xff]
      %v426 = vld [vmem:[#allocation2 + $0x8] sm:$0xff]
      %vm427 = vcmask 523264
      %v429 = vsel %vm427, %v425, 0
      %v432 = vsel %vm427, %v426, 0
      %v435 = vsel %vm427, %v424, 0
      %437 = vmatprep.subr.mxu0 0.0
      %438 = vmatpush1.xpose.msra.mxu0 0.0
      %439 = vmatprep.subr.mxu0 0.0
      %440 = vmatpush1.xpose.msra.mxu0 0.0
      %441 = vmatprep.subr.mxu0 0.0
      %442 = vmatpush1.xpose.msra.mxu0 0.0
      %443 = vmatprep.subr.mxu0 0.0
      %444 = vmatpush1.xpose.msra.mxu0 0.0
      %445 = vmatprep.subr.mxu0 0.0
      %446 = vmatpush1.xpose.msra.mxu0 0.0
      %447 = vmatprep.subr.mxu0 0.0
      %448 = vmatpush1.xpose.msra.mxu0 0.0
      %449 = vmatprep.subr.mxu0 0.0
      %450 = vmatpush1.xpose.msra.mxu0 0.0
      %451 = vmatprep.subr.mxu0 0.0
      %452 = vmatpush1.xpose.msra.mxu0 0.0
      %453 = vmatprep.subr.mxu0 0.0
      %454 = vmatpush1.xpose.msra.mxu0 0.0
      %455 = vmatprep.subr.mxu0 0.0
      %456 = vmatpush1.xpose.msra.mxu0 0.0
      %457 = vmatprep.subr.mxu0 0.0
      %458 = vmatpush1.xpose.msra.mxu0 0.0
      %459 = vmatprep.subr.mxu0 0.0
      %460 = vmatpush1.xpose.msra.mxu0 0.0
      %461 = vmatprep.subr.mxu0 0.0
      %462 = vmatpush1.xpose.msra.mxu0 0.0
      %463 = vmatprep.subr.mxu0 0.0
      %464 = vmatpush1.xpose.msra.mxu0 0.0
      %465 = vmatprep.subr.mxu0 0.0
      %466 = vmatpush1.xpose.msra.mxu0 0.0
      %467 = vmatprep.subr.mxu0 0.0
      %468 = vmatpush1.xpose.msra.mxu0 %v435
      %469 = vmatprep.subr.mxu0 0.0
      %470 = vmatpush2.xpose.msra.mxu0 0.0
      %471 = vmatprep.subr.mxu0 0.0
      %472 = vmatpush2.xpose.msra.mxu0 0.0
      %473 = vmatprep.subr.mxu0 0.0
      %474 = vmatpush2.xpose.msra.mxu0 0.0
      %475 = vmatprep.subr.mxu0 0.0
      %476 = vmatpush2.xpose.msra.mxu0 0.0
      %477 = vmatprep.subr.mxu0 0.0
      %478 = vmatpush2.xpose.msra.mxu0 0.0
      %479 = vmatprep.subr.mxu0 0.0
      %480 = vmatpush2.xpose.msra.mxu0 0.0
      %481 = vmatprep.subr.mxu0 0.0
      %482 = vmatpush2.xpose.msra.mxu0 0.0
      %483 = vmatprep.subr.mxu0 0.0
      %484 = vmatpush2.xpose.msra.mxu0 0.0
      %485 = vmatprep.subr.mxu0 0.0
      %486 = vmatpush2.xpose.msra.mxu0 0.0
      %487 = vmatprep.subr.mxu0 0.0
      %488 = vmatpush2.xpose.msra.mxu0 0.0
      %489 = vmatprep.subr.mxu0 0.0
      %490 = vmatpush2.xpose.msra.mxu0 0.0
      %491 = vmatprep.subr.mxu0 0.0
      %492 = vmatpush2.xpose.msra.mxu0 0.0
      %493 = vmatprep.subr.mxu0 0.0
      %494 = vmatpush2.xpose.msra.mxu0 0.0
      %495 = vmatprep.subr.mxu0 0.0
      %496 = vmatpush2.xpose.msra.mxu0 0.0
      %497 = vmatprep.subr.mxu0 0.0
      %498 = vmatpush2.xpose.msra.mxu0 0.0
      %499 = vmatprep.subr.mxu0 0.0
      %500 = vmatpush2.xpose.msra.mxu0 0.0
      %501 = vmatprep.mubr.f32.mxu0 0.0
      %502 = vmatmul.mubr.f32.gmra.mxu0 %v429
      %v503 = vpop.f32.mrf.mxu0
      %v504 = vadd.f32 0.0, %v503
      %v505 = vpop.f32.mrf.mxu0
      %506 = vmatprep.mubr.f32.mxu0 0.0
      %507 = vmatmul.mubr.f32.gmra.mxu0 %v432
      %v508 = vpop.f32.mrf.mxu0
      %v509 = vadd.f32 0.0, %v508
      %v510 = vpop.f32.mrf.mxu0
      %511 = vdwg.mxu0
      %v512 = vld [vmem:[#allocation3] sm:$0xff]
      %v513 = vld [vmem:[#allocation3 + $0x8] sm:$0xff]
      %vm514 = vcmask 64512
      %v515 = vsel %vm514, %v504, -inf
      %516 = vmax.xlane.f32.xlu0 %v515
      %v517 = vpop.xlane.xlu0 %516
      %v518 = vsel %vm514, %v509, -inf
      %519 = vmax.xlane.f32.xlu0 %v518
      %v520 = vpop.xlane.xlu0 %519
      %v521 = vmax.f32 %v512, %v517
      %v522 = vmax.f32 %v513, %v520
      %v523 = vsub.f32 %v512, %v521
      %v524 = vsub.f32 %v513, %v522
      %v525 = vmul.f32 %v523, 1.442695
      %v526 = vpow.pop %v525
      %v527 = vmul.f32 %v524, 1.442695
      %v528 = vpow.pop %v527
      %530 = vset.pattern.permute.xlu0 0
      %531 = vperm.xlu0 %530, %v521
      %v532 = vpop.permute.xlu0 %531
      %535 = vset.pattern.permute.xlu0 0
      %536 = vperm.xlu0 %535, %v522
      %v537 = vpop.permute.xlu0 %536
      %v539 = vsub.f32 %v504, %v532
      %v540 = vsub.f32 %v509, %v537
      %v541 = vmul.f32 %v539, 1.442695
      %v542 = vpow.pop %v541
      %v543 = vmul.f32 %v540, 1.442695
      %v544 = vpow.pop %v543
      %v545 = vld [vmem:[#allocation4] sm:$0xff]
      %v546 = vld [vmem:[#allocation4 + $0x8] sm:$0xff]
      %v547 = vmul.f32 %v526, %v545
      %v548 = vmul.f32 %v528, %v546
      %v549 = vsel %vm514, %v542, 0.0
      %550 = vadd.xlane.f32.xlu0 %v549
      %v551 = vpop.xlane.xlu0 %550
      %v552 = vsel %vm514, %v544, 0.0
      %553 = vadd.xlane.f32.xlu0 %v552
      %v554 = vpop.xlane.xlu0 %553
      %v555 = vadd.f32 %v547, %v551
      %v556 = vadd.f32 %v548, %v554
      %vm557 = vcmask 7168
      %558 = vst.msk [vmem:[#allocation4] sm:$0xff] %vm557, %v555
      %559 = vst.msk [vmem:[#allocation4 + $0x8] sm:$0xff] %vm557, %v556
      %v560 = vld [vmem:[#allocation5] sm:$0xff]
      %v561 = vld [vmem:[#allocation5 + $0x8] sm:$0xff]
      %563 = vset.pattern.permute.xlu0 0
      %564 = vperm.xlu0 %563, %v526
      %v565 = vpop.permute.xlu0 %564
      %568 = vset.pattern.permute.xlu0 0
      %569 = vperm.xlu0 %568, %v528
      %v570 = vpop.permute.xlu0 %569
      %v572 = vmul.f32 %v565, %v560
      %v573 = vmul.f32 %v570, %v561
      %574 = vrot.lane.b32.xlu0 %v424, 64
      %v575 = vpop.permute.xlu0 %574
      %v578 = vsel %vm514, %v542, 0
      %v581 = vsel %vm514, %v544, 0
      %583 = vmatprep.subr.mxu0 0.0
      %584 = vmatpush1.msra.mxu0 0.0
      %585 = vmatprep.subr.mxu0 0.0
      %586 = vmatpush1.msra.mxu0 0.0
      %587 = vmatprep.subr.mxu0 0.0
      %588 = vmatpush1.msra.mxu0 0.0
      %589 = vmatprep.subr.mxu0 0.0
      %590 = vmatpush1.msra.mxu0 0.0
      %591 = vmatprep.subr.mxu0 0.0
      %592 = vmatpush1.msra.mxu0 0.0
      %593 = vmatprep.subr.mxu0 0.0
      %594 = vmatpush1.msra.mxu0 0.0
      %595 = vmatprep.subr.mxu0 0.0
      %596 = vmatpush1.msra.mxu0 0.0
      %597 = vmatprep.subr.mxu0 0.0
      %598 = vmatpush1.msra.mxu0 0.0
      %599 = vmatprep.subr.mxu0 0.0
      %600 = vmatpush1.msra.mxu0 0.0
      %601 = vmatprep.subr.mxu0 0.0
      %602 = vmatpush1.msra.mxu0 0.0
      %603 = vmatprep.subr.mxu0 0.0
      %604 = vmatpush1.msra.mxu0 0.0
      %605 = vmatprep.subr.mxu0 0.0
      %606 = vmatpush1.msra.mxu0 0.0
      %607 = vmatprep.subr.mxu0 0.0
      %608 = vmatpush1.msra.mxu0 0.0
      %609 = vmatprep.subr.mxu0 0.0
      %610 = vmatpush1.msra.mxu0 0.0
      %611 = vmatprep.subr.mxu0 0.0
      %612 = vmatpush1.msra.mxu0 0.0
      %613 = vmatprep.subr.mxu0 0.0
      %614 = vmatpush1.msra.mxu0 %v575
      %615 = vmatprep.subr.mxu0 0.0
      %616 = vmatpush2.msra.mxu0 0.0
      %617 = vmatprep.subr.mxu0 0.0
      %618 = vmatpush2.msra.mxu0 0.0
      %619 = vmatprep.subr.mxu0 0.0
      %620 = vmatpush2.msra.mxu0 0.0
      %621 = vmatprep.subr.mxu0 0.0
      %622 = vmatpush2.msra.mxu0 0.0
      %623 = vmatprep.subr.mxu0 0.0
      %624 = vmatpush2.msra.mxu0 0.0
      %625 = vmatprep.subr.mxu0 0.0
      %626 = vmatpush2.msra.mxu0 0.0
      %627 = vmatprep.subr.mxu0 0.0
      %628 = vmatpush2.msra.mxu0 0.0
      %629 = vmatprep.subr.mxu0 0.0
      %630 = vmatpush2.msra.mxu0 0.0
      %631 = vmatprep.subr.mxu0 0.0
      %632 = vmatpush2.msra.mxu0 0.0
      %633 = vmatprep.subr.mxu0 0.0
      %634 = vmatpush2.msra.mxu0 0.0
      %635 = vmatprep.subr.mxu0 0.0
      %636 = vmatpush2.msra.mxu0 0.0
      %637 = vmatprep.subr.mxu0 0.0
      %638 = vmatpush2.msra.mxu0 0.0
      %639 = vmatprep.subr.mxu0 0.0
      %640 = vmatpush2.msra.mxu0 0.0
      %641 = vmatprep.subr.mxu0 0.0
      %642 = vmatpush2.msra.mxu0 0.0
      %643 = vmatprep.subr.mxu0 0.0
      %644 = vmatpush2.msra.mxu0 0.0
      %645 = vmatprep.subr.mxu0 0.0
      %646 = vmatpush2.msra.mxu0 0.0
      %647 = vmatprep.mubr.f32.mxu0 0.0
      %648 = vmatmul.mubr.f32.gmra.mxu0 %v578
      %v649 = vpop.f32.mrf.mxu0
      %v650 = vadd.f32 0.0, %v649
      %v651 = vpop.f32.mrf.mxu0
      %652 = vmatprep.mubr.f32.mxu0 0.0
      %653 = vmatmul.mubr.f32.gmra.mxu0 %v581
      %v654 = vpop.f32.mrf.mxu0
      %v655 = vadd.f32 0.0, %v654
      %v656 = vpop.f32.mrf.mxu0
      %657 = vdwg.mxu0
      %v658 = vadd.f32 %v572, %v650
      %v659 = vadd.f32 %v573, %v655
      %660 = vst.msk [vmem:[#allocation5] sm:$0xff] %vm427, %v658
      %661 = vst.msk [vmem:[#allocation5 + $0x8] sm:$0xff] %vm427, %v659
      %662 = vst.msk [vmem:[#allocation3] sm:$0xff] %vm557, %v521
      %663 = vst.msk [vmem:[#allocation3 + $0x8] sm:$0xff] %vm557, %v522
      // Predicated region
      $region41: #{attention_forward.6} parent=35 // pred_check
        %p664 = pneg %p365
      $region42: #{attention_forward.6} parent=35 // pred_check_branch
        %666 = sbr.rel (%p664) target = $region44
      $region43: #{attention_forward.6} parent=35 // pred_region
        %v667 = vld [vmem:[#allocation4] sm:$0xff]
        %v668 = vld [vmem:[#allocation4 + $0x8] sm:$0xff]
        %v669 = vrcp.pop %v667
        %v670 = vrcp.pop %v668
        %v671 = vld [vmem:[#allocation5] sm:$0xff]
        %v672 = vld [vmem:[#allocation5 + $0x8] sm:$0xff]
        %674 = vset.pattern.permute.xlu0 0
        %675 = vperm.xlu0 %674, %v669
        %v676 = vpop.permute.xlu0 %675
        %679 = vset.pattern.permute.xlu0 0
        %680 = vperm.xlu0 %679, %v670
        %v681 = vpop.permute.xlu0 %680
        %v683 = vmul.f32 %v671, %v676
        %v684 = vmul.f32 %v672, %v681
        %685 = vst.msk [vmem:[%s364] sm:$0xff] %vm427, %v683
        %687 = vrot.lane.b32.xlu0 %v684, 64
        %v688 = vpop.permute.xlu0 %687
        %vm690 = vcmask 1048064
        %691 = vst.msk [vmem:[%s364] sm:$0xff] %vm690, %v688
      $region44: #{attention_forward.6} parent=35 // pred_fallthru
        _
      %p692 = scmp.lt.s32.totalorder %s21, 1
      %s693 = scalar_select %p692, %s21, 1
      %p694 = scmp.lt.s32.totalorder %s23, 0
      %s695 = scalar_select %p694, %s23, 0
      %p696 = scmp.lt.s32.totalorder %s22, 1
      %s697 = scalar_select %p696, %s22, 1
      %s698 = smul.addr %s695, 2
      %s699 = sadd.s32 %s697, %s698
      %s700 = smul.addr %s693, 2
      %s701 = sadd.s32 %s699, %s700
      %s702 = smul.addr %s701, 8
      %s703 = scalar_lea.vmem %s4, %s702
      // Predicated region
      $region45: #{attention_forward.6} parent=35 // pred_check
        %p704 = pneg %p179
      $region46: #{attention_forward.6} parent=35 // pred_check_branch
        %706 = sbr.rel (%p704) target = $region48
      $region47: #{attention_forward.6} parent=35 // pred_region
        _
      $region48: #{attention_forward.6} parent=35 // pred_fallthru
        _
    $region36: #{attention_forward.6} parent=5 // pred_fallthru
      _
    %p707 = scmp.le.s32.totalorder 2, %s10
    // Predicated region
    $region49: #{attention_forward.6} parent=5 // pred_check
      %p708 = pneg %p707
    $region50: #{attention_forward.6} parent=5 // pred_check_branch
      %710 = sbr.rel (%p708) target = $region52
    $region51: #{attention_forward.6} parent=5 // pred_region
      %s711 = ssub.s32 %s10, 2
      // Predicated region
      $region53: #{attention_forward.6} parent=51 // pred_check
        %p712 = pneg %p185
      $region54: #{attention_forward.6} parent=51 // pred_check_branch
        %714 = sbr.rel (%p712) target = $region56
      $region55: #{attention_forward.6} parent=51 // pred_region
        %p715 = scmp.lt.s32.totalorder %s25, 1
        %s716 = scalar_select %p715, %s25, 1
        %p717 = scmp.lt.s32.totalorder %s27, 0
        %s718 = scalar_select %p717, %s27, 0
        %p719 = scmp.lt.s32.totalorder %s26, 1
        %s720 = scalar_select %p719, %s26, 1
        %s721 = smul.addr %s718, 2
        %s722 = sadd.s32 %s720, %s721
        %s723 = smul.addr %s716, 2
        %s724 = sadd.s32 %s722, %s723
        %s725 = smul.addr %s724, 8
        %s726 = scalar_lea.vmem %s4, %s725
      $region56: #{attention_forward.6} parent=51 // pred_fallthru
        _
    $region52: #{attention_forward.6} parent=5 // pred_fallthru
      _
  $region6: #{attention_forward.6} parent=0 // loop_footer
    %s14 = sadd.s32 1, %s10
  $region7: #{attention_forward.6} parent=0 // loop_footer_branch
    %9 = sbr.rel target = $region3
  $region8: #{attention_forward.6} parent=0 // loop_exit
    _

</llo_original>
